<compile_context>
chip_gen: v5e
topology: v5e:2x2
jax: 0.10.0
libtpu: 0.0.40
codegen_flags: <defaults>
</compile_context>

<pallas_src>
import functools

import jax
import jax.numpy as jnp
from jax import lax
from jax.experimental import pallas as pl
from jax.experimental.pallas import tpu as pltpu

KH = KW = 3
PAD = 1
NEG_SLOPE = 0.01
BN_EPS = 1e-5
LANE = 128                       # TPU lane width: channel padding target
VMEM_LIMIT = 32 * 1024 * 1024    # explicit scoped-VMEM budget (safe on v5e/v6e/v7x)


def _round_up(x, m):
    return (x + m - 1) // m * m


def _pick_row_tile(ho):
    """Output rows per tile; keeps the matmul M-tile (th*wo) MXU friendly."""
    for cand in (8, 4, 2):
        if ho % cand == 0:
            return cand
    return 1


# ----------------------- pass 1: conv + fused BN statistics -----------------------
def _conv3x3_stats_kernel(xpad_ref, w_ref, y_ref, stats_ref, acc_ref, *,
                          stride, th, wo):
    """Grid = (cout_tile, batch, row_tile).

    xpad_ref : (1, Hp, Wp, Cin_p)   full padded image of batch b (revisited input)
    w_ref    : (KH*KW, Cin_p, tco)  weight slab for this cout tile (revisited input)
    y_ref    : (1, th, wo, tco)     conv output tile (f32, pre-BN)
    stats_ref: (2, tco)             per-channel [sum; sum_sq]; revisit-accumulated
                                    across the (batch, row-tile) grid axes
    acc_ref  : (th*wo, tco) f32     VMEM scratch accumulator
    """
    b = pl.program_id(1)
    rt = pl.program_id(2)
    cin = xpad_ref.shape[-1]
    row0 = pl.multiple_of(rt * (th * stride), th * stride)

    acc_ref[...] = jnp.zeros_like(acc_ref)
    for kh in range(KH):                         # static unrolled 3x3 taps
        for kw in range(KW):
            if stride == 1:
                patch = xpad_ref[0, pl.ds(row0 + kh, th), pl.ds(kw, wo), :]
            else:
                # TODO(synk): for stride>1 a wrapper-side space-to-depth phase
                # split would avoid these strided sublane reads.
                patch = xpad_ref[0, pl.ds(row0 + kh, th, stride),
                                 pl.ds(kw, wo, stride), :]
            # (th*wo, Cin_p) @ (Cin_p, tco) on the MXU, f32 accumulation.
            # Operands kept in their native dtype (no upcast inserted).
            acc_ref[...] += jnp.dot(patch.reshape(th * wo, cin),
                                    w_ref[kh * KW + kw],
                                    preferred_element_type=jnp.float32)

    y = acc_ref[...]
    y_ref[0] = y.reshape(th, wo, -1).astype(y_ref.dtype)

    # BatchNorm batch statistics fused into the conv pass (revisit accumulator).
    @pl.when(jnp.logical_and(b == 0, rt == 0))
    def _():
        stats_ref[...] = jnp.zeros_like(stats_ref)

    stats_ref[0:1, :] += jnp.sum(y, axis=0, keepdims=True)
    stats_ref[1:2, :] += jnp.sum(y * y, axis=0, keepdims=True)


# --------------------- pass 2: streaming normalize + LeakyReLU ---------------------
def _bn_apply_kernel(stats_ref, gamma_ref, beta_ref, y_ref, o_ref, *, inv_count):
    """BN (training-mode batch stats, biased variance) + LeakyReLU on one tile."""
    tco = stats_ref.shape[-1]
    mean = stats_ref[0:1, :] * inv_count                     # (1, tco)
    var = stats_ref[1:2, :] * inv_count - mean * mean        # biased variance
    scale = gamma_ref[...] * lax.rsqrt(var + BN_EPS)         # (1, tco)
    shift = beta_ref[...] - mean * scale
    z = y_ref[...] * scale.reshape(1, 1, 1, tco) + shift.reshape(1, 1, 1, tco)
    o_ref[...] = jnp.maximum(z, NEG_SLOPE * z).astype(o_ref.dtype)
    # TODO(synk): running_mean/running_var update (a training-time side effect) is
    # not part of the module's returned value and is omitted.


@functools.partial(jax.jit, static_argnames=("stride",))
def conv_bn_forward(x_nchw, weight_oihw, gamma, beta, stride=1):
    """Forward pass of conv_bn. Input/output are NCHW float32 like PyTorch."""
    n, cin, h, w = x_nchw.shape
    cout = weight_oihw.shape[0]
    ho = (h + 2 * PAD - KH) // stride + 1
    wo = (w + 2 * PAD - KW) // stride + 1
    hp, wp = h + 2 * PAD, w + 2 * PAD

    # ---- layout glue: NCHW -> NHWC, pad channels to the 128-lane width ----
    cin_p = _round_up(cin, LANE)
    cout_p = _round_up(cout, LANE)
    x_nhwc = jnp.transpose(x_nchw, (0, 2, 3, 1))
    xpad = jnp.pad(x_nhwc, ((0, 0), (PAD, PAD), (PAD, PAD), (0, cin_p - cin)))
    w_hwio = jnp.transpose(weight_oihw, (2, 3, 1, 0))            # (KH, KW, Cin, Cout)
    w_pad = jnp.pad(w_hwio, ((0, 0), (0, 0), (0, cin_p - cin), (0, cout_p - cout)))
    w_taps = w_pad.reshape(KH * KW, cin_p, cout_p)
    gamma_p = jnp.pad(gamma, (0, cout_p - cout), constant_values=1.0).reshape(1, cout_p)
    beta_p = jnp.pad(beta, (0, cout_p - cout)).reshape(1, cout_p)

    th = _pick_row_tile(ho)          # output rows per tile (M tile = th * wo)
    tco = LANE                       # cout tile = 128: fits v5e/v6e/v7x MXUs
    n_ht = ho // th
    n_co = cout_p // tco
    # cout tile is outermost so each stats block sees its (batch, row) steps
    # consecutively; parallel dims precede arbitrary dims.
    grid = (n_co, n, n_ht)

    conv_fn = pl.pallas_call(
        functools.partial(_conv3x3_stats_kernel, stride=stride, th=th, wo=wo),
        grid=grid,
        in_specs=[
            # NOTE: the full padded image stays resident per batch element (the
            # block index ignores co/rt so it is fetched once per b).  For very
            # large spatial sizes this block should additionally be halo-tiled
            # over H (pl.Element) to respect v7x's 64 MiB VMEM.
            pl.BlockSpec((1, hp, wp, cin_p), lambda co, b, rt: (b, 0, 0, 0)),
            pl.BlockSpec((KH * KW, cin_p, tco), lambda co, b, rt: (0, 0, co)),
        ],
        out_specs=(
            pl.BlockSpec((1, th, wo, tco), lambda co, b, rt: (b, rt, 0, co)),
            pl.BlockSpec((2, tco), lambda co, b, rt: (0, co)),
        ),
        out_shape=(
            jax.ShapeDtypeStruct((n, ho, wo, cout_p), jnp.float32),
            jax.ShapeDtypeStruct((2, cout_p), jnp.float32),
        ),
        scratch_shapes=[pltpu.VMEM((th * wo, tco), jnp.float32)],
        compiler_params=pltpu.CompilerParams(
            dimension_semantics=("parallel", "arbitrary", "arbitrary"),
            vmem_limit_bytes=VMEM_LIMIT),
    )
    y_conv, stats = conv_fn(xpad, w_taps)

    inv_count = 1.0 / float(n * ho * wo)
    apply_fn = pl.pallas_call(
        functools.partial(_bn_apply_kernel, inv_count=inv_count),
        grid=grid,
        in_specs=[
            pl.BlockSpec((2, tco), lambda co, b, rt: (0, co)),
            pl.BlockSpec((1, tco), lambda co, b, rt: (0, co)),
            pl.BlockSpec((1, tco), lambda co, b, rt: (0, co)),
            pl.BlockSpec((1, th, wo, tco), lambda co, b, rt: (b, rt, 0, co)),
        ],
        out_specs=pl.BlockSpec((1, th, wo, tco), lambda co, b, rt: (b, rt, 0, co)),
        out_shape=jax.ShapeDtypeStruct((n, ho, wo, cout_p), jnp.float32),
        input_output_aliases={3: 0},          # write BN output over y_conv in place
        compiler_params=pltpu.CompilerParams(
            dimension_semantics=("parallel", "parallel", "parallel"),
            vmem_limit_bytes=VMEM_LIMIT),
    )
    out_nhwc = apply_fn(stats, gamma_p, beta_p, y_conv)

    # ---- layout glue: drop channel padding, back to NCHW ----
    return jnp.transpose(out_nhwc[..., :cout], (0, 3, 1, 2))


def _reference(x_nchw, weight_oihw, gamma, beta, stride):
    """Pure-JAX reference matching PyTorch conv + BN(train) + LeakyReLU semantics."""
    xh = jnp.transpose(x_nchw, (0, 2, 3, 1))
    w_hwio = jnp.transpose(weight_oihw, (2, 3, 1, 0))
    y = lax.conv_general_dilated(
        xh, w_hwio, window_strides=(stride, stride),
        padding=((PAD, PAD), (PAD, PAD)),
        dimension_numbers=("NHWC", "HWIO", "NHWC"))
    mean = jnp.mean(y, axis=(0, 1, 2))
    var = jnp.mean(jnp.square(y - mean), axis=(0, 1, 2))
    z = (y - mean) * lax.rsqrt(var + BN_EPS) * gamma + beta
    z = jnp.where(z >= 0, z, NEG_SLOPE * z)
    return jnp.transpose(z, (0, 3, 1, 2))


if __name__ == "__main__":
    N, Cin, H, W = 2, 4, 16, 16
    Cout, stride = 8, 1

    key = jax.random.PRNGKey(0)
    kx, kw, kg, kb = jax.random.split(key, 4)
    x = jax.random.normal(kx, (N, Cin, H, W), jnp.float32)
    weight = jax.random.normal(kw, (Cout, Cin, KH, KW), jnp.float32) * 0.1
    # PyTorch BatchNorm2d defaults are gamma=1, beta=0; perturb slightly so the
    # affine path is actually exercised (still deterministic).
    gamma = 1.0 + 0.1 * jax.random.normal(kg, (Cout,), jnp.float32)
    beta = 0.1 * jax.random.normal(kb, (Cout,), jnp.float32)

    out = conv_bn_forward(x, weight, gamma, beta, stride=stride)
    out = jax.block_until_ready(out)

    ref = _reference(x, weight, gamma, beta, stride)
    assert out.shape == (N, Cout, H // stride, W // stride)
    assert jnp.allclose(out, ref, atol=1e-4, rtol=1e-4), "mismatch vs reference"

    print("KERNEL_OK")
</pallas_src>

<mosaic_0001>
module attributes {stable_mosaic.version = 11 : i64} {
  func.func @_conv3x3_stats_kernel(%arg0: i32, %arg1: i32, %arg2: i32, %arg3: memref<1x18x18x128xf32, #tpu.memory_space<vmem>>, %arg4: memref<9x128x128xf32, #tpu.memory_space<vmem>>, %arg5: memref<1x8x16x128xf32, #tpu.memory_space<vmem>>, %arg6: memref<2x128xf32, #tpu.memory_space<vmem>>, %arg7: memref<128x128xf32, #tpu.memory_space<vmem>>) attributes {dimension_semantics = [#tpu.dimension_semantics<parallel>, #tpu.dimension_semantics<arbitrary>, #tpu.dimension_semantics<arbitrary>], iteration_bounds = array<i64: 1, 2, 2>, scalar_prefetch = 0 : i64, scratch_operands = 1 : i64, tpu.core_type = #tpu.core_type<tc>, window_params = [{transform_indices = @transform_0, window_bounds = array<i64: 1, 18, 18, 128>}, {transform_indices = @transform_1, window_bounds = array<i64: 9, 128, 128>}, {transform_indices = @transform_2, window_bounds = array<i64: 1, 8, 16, 128>}, {transform_indices = @transform_3, window_bounds = array<i64: 2, 128>}]} {
    %c8_i32 = arith.constant 8 : i32
    %0 = arith.muli %arg2, %c8_i32 : i32
    %1 = tpu.assume_multiple %0, 8 : i32
    %cst = arith.constant 0.000000e+00 : f32
    %2 = vector.broadcast %cst : f32 to vector<128x128xf32>
    %c0 = arith.constant 0 : index
    %c0_0 = arith.constant 0 : index
    %3 = vector.load %arg7[%c0, %c0_0] : memref<128x128xf32, #tpu.memory_space<vmem>>, vector<128x128xf32>
    tpu.vector_store %arg7[%c0, %c0_0], %2 {strides = array<i32>} : memref<128x128xf32, #tpu.memory_space<vmem>>, vector<128x128xf32>,
    %c0_i32 = arith.constant 0 : i32
    %4 = arith.addi %1, %c0_i32 : i32
    %c0_1 = arith.constant 0 : index
    %5 = arith.index_cast %4 : i32 to index
    %c0_2 = arith.constant 0 : index
    %c0_3 = arith.constant 0 : index
    %6 = vector.load %arg3[%c0_1, %5, %c0_2, %c0_3] : memref<1x18x18x128xf32, #tpu.memory_space<vmem>>, vector<1x8x16x128xf32>
    %7 = vector.shape_cast %6 : vector<1x8x16x128xf32> to vector<8x16x128xf32>
    %c0_4 = arith.constant 0 : index
    %c0_5 = arith.constant 0 : index
    %8 = vector.load %arg7[%c0_4, %c0_5] : memref<128x128xf32, #tpu.memory_space<vmem>>, vector<128x128xf32>
    %9 = vector.shape_cast %7 : vector<8x16x128xf32> to vector<128x128xf32>
    %c0_6 = arith.constant 0 : index
    %c0_7 = arith.constant 0 : index
    %c0_8 = arith.constant 0 : index
    %10 = vector.load %arg4[%c0_6, %c0_7, %c0_8] : memref<9x128x128xf32, #tpu.memory_space<vmem>>, vector<1x128x128xf32>
    %11 = vector.shape_cast %10 : vector<1x128x128xf32> to vector<128x128xf32>
    %cst_9 = arith.constant dense<0.000000e+00> : vector<128x128xf32>
    %12 = tpu.matmul %9, %11, %cst_9 {dimension_numbers = #tpu.dot_dimension_numbers<[1], [0], [0], [1], [0, 0, 1, 1], [], []>} : vector<128x128xf32>, vector<128x128xf32>, vector<128x128xf32> -> vector<128x128xf32>
    %13 = arith.addf %8, %12 : vector<128x128xf32>
    %c0_10 = arith.constant 0 : index
    %c0_11 = arith.constant 0 : index
    %14 = vector.load %arg7[%c0_10, %c0_11] : memref<128x128xf32, #tpu.memory_space<vmem>>, vector<128x128xf32>
    tpu.vector_store %arg7[%c0_10, %c0_11], %13 {strides = array<i32>} : memref<128x128xf32, #tpu.memory_space<vmem>>, vector<128x128xf32>,
    %c0_i32_12 = arith.constant 0 : i32
    %15 = arith.addi %1, %c0_i32_12 : i32
    %c0_13 = arith.constant 0 : index
    %16 = arith.index_cast %15 : i32 to index
    %c1 = arith.constant 1 : index
    %c0_14 = arith.constant 0 : index
    %17 = vector.load %arg3[%c0_13, %16, %c1, %c0_14] : memref<1x18x18x128xf32, #tpu.memory_space<vmem>>, vector<1x8x16x128xf32>
    %18 = vector.shape_cast %17 : vector<1x8x16x128xf32> to vector<8x16x128xf32>
    %c0_15 = arith.constant 0 : index
    %c0_16 = arith.constant 0 : index
    %19 = vector.load %arg7[%c0_15, %c0_16] : memref<128x128xf32, #tpu.memory_space<vmem>>, vector<128x128xf32>
    %20 = vector.shape_cast %18 : vector<8x16x128xf32> to vector<128x128xf32>
    %c1_17 = arith.constant 1 : index
    %c0_18 = arith.constant 0 : index
    %c0_19 = arith.constant 0 : index
    %21 = vector.load %arg4[%c1_17, %c0_18, %c0_19] : memref<9x128x128xf32, #tpu.memory_space<vmem>>, vector<1x128x128xf32>
    %22 = vector.shape_cast %21 : vector<1x128x128xf32> to vector<128x128xf32>
    %cst_20 = arith.constant dense<0.000000e+00> : vector<128x128xf32>
    %23 = tpu.matmul %20, %22, %cst_20 {dimension_numbers = #tpu.dot_dimension_numbers<[1], [0], [0], [1], [0, 0, 1, 1], [], []>} : vector<128x128xf32>, vector<128x128xf32>, vector<128x128xf32> -> vector<128x128xf32>
    %24 = arith.addf %19, %23 : vector<128x128xf32>
    %c0_21 = arith.constant 0 : index
    %c0_22 = arith.constant 0 : index
    %25 = vector.load %arg7[%c0_21, %c0_22] : memref<128x128xf32, #tpu.memory_space<vmem>>, vector<128x128xf32>
    tpu.vector_store %arg7[%c0_21, %c0_22], %24 {strides = array<i32>} : memref<128x128xf32, #tpu.memory_space<vmem>>, vector<128x128xf32>,
    %c0_i32_23 = arith.constant 0 : i32
    %26 = arith.addi %1, %c0_i32_23 : i32
    %c0_24 = arith.constant 0 : index
    %27 = arith.index_cast %26 : i32 to index
    %c2 = arith.constant 2 : index
    %c0_25 = arith.constant 0 : index
    %28 = vector.load %arg3[%c0_24, %27, %c2, %c0_25] : memref<1x18x18x128xf32, #tpu.memory_space<vmem>>, vector<1x8x16x128xf32>
    %29 = vector.shape_cast %28 : vector<1x8x16x128xf32> to vector<8x16x128xf32>
    %c0_26 = arith.constant 0 : index
    %c0_27 = arith.constant 0 : index
    %30 = vector.load %arg7[%c0_26, %c0_27] : memref<128x128xf32, #tpu.memory_space<vmem>>, vector<128x128xf32>
    %31 = vector.shape_cast %29 : vector<8x16x128xf32> to vector<128x128xf32>
    %c2_28 = arith.constant 2 : index
    %c0_29 = arith.constant 0 : index
    %c0_30 = arith.constant 0 : index
    %32 = vector.load %arg4[%c2_28, %c0_29, %c0_30] : memref<9x128x128xf32, #tpu.memory_space<vmem>>, vector<1x128x128xf32>
    %33 = vector.shape_cast %32 : vector<1x128x128xf32> to vector<128x128xf32>
    %cst_31 = arith.constant dense<0.000000e+00> : vector<128x128xf32>
    %34 = tpu.matmul %31, %33, %cst_31 {dimension_numbers = #tpu.dot_dimension_numbers<[1], [0], [0], [1], [0, 0, 1, 1], [], []>} : vector<128x128xf32>, vector<128x128xf32>, vector<128x128xf32> -> vector<128x128xf32>
    %35 = arith.addf %30, %34 : vector<128x128xf32>
    %c0_32 = arith.constant 0 : index
    %c0_33 = arith.constant 0 : index
    %36 = vector.load %arg7[%c0_32, %c0_33] : memref<128x128xf32, #tpu.memory_space<vmem>>, vector<128x128xf32>
    tpu.vector_store %arg7[%c0_32, %c0_33], %35 {strides = array<i32>} : memref<128x128xf32, #tpu.memory_space<vmem>>, vector<128x128xf32>,
    %c1_i32 = arith.constant 1 : i32
    %37 = arith.addi %1, %c1_i32 : i32
    %c0_34 = arith.constant 0 : index
    %38 = arith.index_cast %37 : i32 to index
    %c0_35 = arith.constant 0 : index
    %c0_36 = arith.constant 0 : index
    %39 = vector.load %arg3[%c0_34, %38, %c0_35, %c0_36] : memref<1x18x18x128xf32, #tpu.memory_space<vmem>>, vector<1x8x16x128xf32>
    %40 = vector.shape_cast %39 : vector<1x8x16x128xf32> to vector<8x16x128xf32>
    %c0_37 = arith.constant 0 : index
    %c0_38 = arith.constant 0 : index
    %41 = vector.load %arg7[%c0_37, %c0_38] : memref<128x128xf32, #tpu.memory_space<vmem>>, vector<128x128xf32>
    %42 = vector.shape_cast %40 : vector<8x16x128xf32> to vector<128x128xf32>
    %c3 = arith.constant 3 : index
    %c0_39 = arith.constant 0 : index
    %c0_40 = arith.constant 0 : index
    %43 = vector.load %arg4[%c3, %c0_39, %c0_40] : memref<9x128x128xf32, #tpu.memory_space<vmem>>, vector<1x128x128xf32>
    %44 = vector.shape_cast %43 : vector<1x128x128xf32> to vector<128x128xf32>
    %cst_41 = arith.constant dense<0.000000e+00> : vector<128x128xf32>
    %45 = tpu.matmul %42, %44, %cst_41 {dimension_numbers = #tpu.dot_dimension_numbers<[1], [0], [0], [1], [0, 0, 1, 1], [], []>} : vector<128x128xf32>, vector<128x128xf32>, vector<128x128xf32> -> vector<128x128xf32>
    %46 = arith.addf %41, %45 : vector<128x128xf32>
    %c0_42 = arith.constant 0 : index
    %c0_43 = arith.constant 0 : index
    %47 = vector.load %arg7[%c0_42, %c0_43] : memref<128x128xf32, #tpu.memory_space<vmem>>, vector<128x128xf32>
    tpu.vector_store %arg7[%c0_42, %c0_43], %46 {strides = array<i32>} : memref<128x128xf32, #tpu.memory_space<vmem>>, vector<128x128xf32>,
    %c1_i32_44 = arith.constant 1 : i32
    %48 = arith.addi %1, %c1_i32_44 : i32
    %c0_45 = arith.constant 0 : index
    %49 = arith.index_cast %48 : i32 to index
    %c1_46 = arith.constant 1 : index
    %c0_47 = arith.constant 0 : index
    %50 = vector.load %arg3[%c0_45, %49, %c1_46, %c0_47] : memref<1x18x18x128xf32, #tpu.memory_space<vmem>>, vector<1x8x16x128xf32>
    %51 = vector.shape_cast %50 : vector<1x8x16x128xf32> to vector<8x16x128xf32>
    %c0_48 = arith.constant 0 : index
    %c0_49 = arith.constant 0 : index
    %52 = vector.load %arg7[%c0_48, %c0_49] : memref<128x128xf32, #tpu.memory_space<vmem>>, vector<128x128xf32>
    %53 = vector.shape_cast %51 : vector<8x16x128xf32> to vector<128x128xf32>
    %c4 = arith.constant 4 : index
    %c0_50 = arith.constant 0 : index
    %c0_51 = arith.constant 0 : index
    %54 = vector.load %arg4[%c4, %c0_50, %c0_51] : memref<9x128x128xf32, #tpu.memory_space<vmem>>, vector<1x128x128xf32>
    %55 = vector.shape_cast %54 : vector<1x128x128xf32> to vector<128x128xf32>
    %cst_52 = arith.constant dense<0.000000e+00> : vector<128x128xf32>
    %56 = tpu.matmul %53, %55, %cst_52 {dimension_numbers = #tpu.dot_dimension_numbers<[1], [0], [0], [1], [0, 0, 1, 1], [], []>} : vector<128x128xf32>, vector<128x128xf32>, vector<128x128xf32> -> vector<128x128xf32>
    %57 = arith.addf %52, %56 : vector<128x128xf32>
    %c0_53 = arith.constant 0 : index
    %c0_54 = arith.constant 0 : index
    %58 = vector.load %arg7[%c0_53, %c0_54] : memref<128x128xf32, #tpu.memory_space<vmem>>, vector<128x128xf32>
    tpu.vector_store %arg7[%c0_53, %c0_54], %57 {strides = array<i32>} : memref<128x128xf32, #tpu.memory_space<vmem>>, vector<128x128xf32>,
    %c1_i32_55 = arith.constant 1 : i32
    %59 = arith.addi %1, %c1_i32_55 : i32
    %c0_56 = arith.constant 0 : index
    %60 = arith.index_cast %59 : i32 to index
    %c2_57 = arith.constant 2 : index
    %c0_58 = arith.constant 0 : index
    %61 = vector.load %arg3[%c0_56, %60, %c2_57, %c0_58] : memref<1x18x18x128xf32, #tpu.memory_space<vmem>>, vector<1x8x16x128xf32>
    %62 = vector.shape_cast %61 : vector<1x8x16x128xf32> to vector<8x16x128xf32>
    %c0_59 = arith.constant 0 : index
    %c0_60 = arith.constant 0 : index
    %63 = vector.load %arg7[%c0_59, %c0_60] : memref<128x128xf32, #tpu.memory_space<vmem>>, vector<128x128xf32>
    %64 = vector.shape_cast %62 : vector<8x16x128xf32> to vector<128x128xf32>
    %c5 = arith.constant 5 : index
    %c0_61 = arith.constant 0 : index
    %c0_62 = arith.constant 0 : index
    %65 = vector.load %arg4[%c5, %c0_61, %c0_62] : memref<9x128x128xf32, #tpu.memory_space<vmem>>, vector<1x128x128xf32>
    %66 = vector.shape_cast %65 : vector<1x128x128xf32> to vector<128x128xf32>
    %cst_63 = arith.constant dense<0.000000e+00> : vector<128x128xf32>
    %67 = tpu.matmul %64, %66, %cst_63 {dimension_numbers = #tpu.dot_dimension_numbers<[1], [0], [0], [1], [0, 0, 1, 1], [], []>} : vector<128x128xf32>, vector<128x128xf32>, vector<128x128xf32> -> vector<128x128xf32>
    %68 = arith.addf %63, %67 : vector<128x128xf32>
    %c0_64 = arith.constant 0 : index
    %c0_65 = arith.constant 0 : index
    %69 = vector.load %arg7[%c0_64, %c0_65] : memref<128x128xf32, #tpu.memory_space<vmem>>, vector<128x128xf32>
    tpu.vector_store %arg7[%c0_64, %c0_65], %68 {strides = array<i32>} : memref<128x128xf32, #tpu.memory_space<vmem>>, vector<128x128xf32>,
    %c2_i32 = arith.constant 2 : i32
    %70 = arith.addi %1, %c2_i32 : i32
    %c0_66 = arith.constant 0 : index
    %71 = arith.index_cast %70 : i32 to index
    %c0_67 = arith.constant 0 : index
    %c0_68 = arith.constant 0 : index
    %72 = vector.load %arg3[%c0_66, %71, %c0_67, %c0_68] : memref<1x18x18x128xf32, #tpu.memory_space<vmem>>, vector<1x8x16x128xf32>
    %73 = vector.shape_cast %72 : vector<1x8x16x128xf32> to vector<8x16x128xf32>
    %c0_69 = arith.constant 0 : index
    %c0_70 = arith.constant 0 : index
    %74 = vector.load %arg7[%c0_69, %c0_70] : memref<128x128xf32, #tpu.memory_space<vmem>>, vector<128x128xf32>
    %75 = vector.shape_cast %73 : vector<8x16x128xf32> to vector<128x128xf32>
    %c6 = arith.constant 6 : index
    %c0_71 = arith.constant 0 : index
    %c0_72 = arith.constant 0 : index
    %76 = vector.load %arg4[%c6, %c0_71, %c0_72] : memref<9x128x128xf32, #tpu.memory_space<vmem>>, vector<1x128x128xf32>
    %77 = vector.shape_cast %76 : vector<1x128x128xf32> to vector<128x128xf32>
    %cst_73 = arith.constant dense<0.000000e+00> : vector<128x128xf32>
    %78 = tpu.matmul %75, %77, %cst_73 {dimension_numbers = #tpu.dot_dimension_numbers<[1], [0], [0], [1], [0, 0, 1, 1], [], []>} : vector<128x128xf32>, vector<128x128xf32>, vector<128x128xf32> -> vector<128x128xf32>
    %79 = arith.addf %74, %78 : vector<128x128xf32>
    %c0_74 = arith.constant 0 : index
    %c0_75 = arith.constant 0 : index
    %80 = vector.load %arg7[%c0_74, %c0_75] : memref<128x128xf32, #tpu.memory_space<vmem>>, vector<128x128xf32>
    tpu.vector_store %arg7[%c0_74, %c0_75], %79 {strides = array<i32>} : memref<128x128xf32, #tpu.memory_space<vmem>>, vector<128x128xf32>,
    %c2_i32_76 = arith.constant 2 : i32
    %81 = arith.addi %1, %c2_i32_76 : i32
    %c0_77 = arith.constant 0 : index
    %82 = arith.index_cast %81 : i32 to index
    %c1_78 = arith.constant 1 : index
    %c0_79 = arith.constant 0 : index
    %83 = vector.load %arg3[%c0_77, %82, %c1_78, %c0_79] : memref<1x18x18x128xf32, #tpu.memory_space<vmem>>, vector<1x8x16x128xf32>
    %84 = vector.shape_cast %83 : vector<1x8x16x128xf32> to vector<8x16x128xf32>
    %c0_80 = arith.constant 0 : index
    %c0_81 = arith.constant 0 : index
    %85 = vector.load %arg7[%c0_80, %c0_81] : memref<128x128xf32, #tpu.memory_space<vmem>>, vector<128x128xf32>
    %86 = vector.shape_cast %84 : vector<8x16x128xf32> to vector<128x128xf32>
    %c7 = arith.constant 7 : index
    %c0_82 = arith.constant 0 : index
    %c0_83 = arith.constant 0 : index
    %87 = vector.load %arg4[%c7, %c0_82, %c0_83] : memref<9x128x128xf32, #tpu.memory_space<vmem>>, vector<1x128x128xf32>
    %88 = vector.shape_cast %87 : vector<1x128x128xf32> to vector<128x128xf32>
    %cst_84 = arith.constant dense<0.000000e+00> : vector<128x128xf32>
    %89 = tpu.matmul %86, %88, %cst_84 {dimension_numbers = #tpu.dot_dimension_numbers<[1], [0], [0], [1], [0, 0, 1, 1], [], []>} : vector<128x128xf32>, vector<128x128xf32>, vector<128x128xf32> -> vector<128x128xf32>
    %90 = arith.addf %85, %89 : vector<128x128xf32>
    %c0_85 = arith.constant 0 : index
    %c0_86 = arith.constant 0 : index
    %91 = vector.load %arg7[%c0_85, %c0_86] : memref<128x128xf32, #tpu.memory_space<vmem>>, vector<128x128xf32>
    tpu.vector_store %arg7[%c0_85, %c0_86], %90 {strides = array<i32>} : memref<128x128xf32, #tpu.memory_space<vmem>>, vector<128x128xf32>,
    %c2_i32_87 = arith.constant 2 : i32
    %92 = arith.addi %1, %c2_i32_87 : i32
    %c0_88 = arith.constant 0 : index
    %93 = arith.index_cast %92 : i32 to index
    %c2_89 = arith.constant 2 : index
    %c0_90 = arith.constant 0 : index
    %94 = vector.load %arg3[%c0_88, %93, %c2_89, %c0_90] : memref<1x18x18x128xf32, #tpu.memory_space<vmem>>, vector<1x8x16x128xf32>
    %95 = vector.shape_cast %94 : vector<1x8x16x128xf32> to vector<8x16x128xf32>
    %c0_91 = arith.constant 0 : index
    %c0_92 = arith.constant 0 : index
    %96 = vector.load %arg7[%c0_91, %c0_92] : memref<128x128xf32, #tpu.memory_space<vmem>>, vector<128x128xf32>
    %97 = vector.shape_cast %95 : vector<8x16x128xf32> to vector<128x128xf32>
    %c8 = arith.constant 8 : index
    %c0_93 = arith.constant 0 : index
    %c0_94 = arith.constant 0 : index
    %98 = vector.load %arg4[%c8, %c0_93, %c0_94] : memref<9x128x128xf32, #tpu.memory_space<vmem>>, vector<1x128x128xf32>
    %99 = vector.shape_cast %98 : vector<1x128x128xf32> to vector<128x128xf32>
    %cst_95 = arith.constant dense<0.000000e+00> : vector<128x128xf32>
    %100 = tpu.matmul %97, %99, %cst_95 {dimension_numbers = #tpu.dot_dimension_numbers<[1], [0], [0], [1], [0, 0, 1, 1], [], []>} : vector<128x128xf32>, vector<128x128xf32>, vector<128x128xf32> -> vector<128x128xf32>
    %101 = arith.addf %96, %100 : vector<128x128xf32>
    %c0_96 = arith.constant 0 : index
    %c0_97 = arith.constant 0 : index
    %102 = vector.load %arg7[%c0_96, %c0_97] : memref<128x128xf32, #tpu.memory_space<vmem>>, vector<128x128xf32>
    tpu.vector_store %arg7[%c0_96, %c0_97], %101 {strides = array<i32>} : memref<128x128xf32, #tpu.memory_space<vmem>>, vector<128x128xf32>,
    %c0_98 = arith.constant 0 : index
    %c0_99 = arith.constant 0 : index
    %103 = vector.load %arg7[%c0_98, %c0_99] : memref<128x128xf32, #tpu.memory_space<vmem>>, vector<128x128xf32>
    %104 = vector.shape_cast %103 : vector<128x128xf32> to vector<8x16x128xf32>
    %c0_100 = arith.constant 0 : index
    %c0_101 = arith.constant 0 : index
    %c0_102 = arith.constant 0 : index
    %c0_103 = arith.constant 0 : index
    %105 = vector.load %arg5[%c0_100, %c0_101, %c0_102, %c0_103] : memref<1x8x16x128xf32, #tpu.memory_space<vmem>>, vector<1x8x16x128xf32>
    %106 = vector.shape_cast %105 : vector<1x8x16x128xf32> to vector<8x16x128xf32>
    %107 = vector.shape_cast %104 : vector<8x16x128xf32> to vector<1x8x16x128xf32>
    tpu.vector_store %arg5[%c0_100, %c0_101, %c0_102, %c0_103], %107 {strides = array<i32>} : memref<1x8x16x128xf32, #tpu.memory_space<vmem>>, vector<1x8x16x128xf32>,
    %c0_i32_104 = arith.constant 0 : i32
    %108 = arith.cmpi eq, %arg1, %c0_i32_104 : i32
    %c0_i32_105 = arith.constant 0 : i32
    %109 = arith.cmpi eq, %arg2, %c0_i32_105 : i32
    %110 = arith.andi %108, %109 : i1
    %111 = arith.extui %110 : i1 to i32
    %c0_i32_106 = arith.constant 0 : i32
    %112 = arith.cmpi ne, %111, %c0_i32_106 : i32
    scf.if %112 {
      %cst_117 = arith.constant 0.000000e+00 : f32
      %124 = vector.broadcast %cst_117 : f32 to vector<2x128xf32>
      %c0_118 = arith.constant 0 : index
      %c0_119 = arith.constant 0 : index
      %125 = vector.load %arg6[%c0_118, %c0_119] : memref<2x128xf32, #tpu.memory_space<vmem>>, vector<2x128xf32>
      tpu.vector_store %arg6[%c0_118, %c0_119], %124 {strides = array<i32>} : memref<2x128xf32, #tpu.memory_space<vmem>>, vector<2x128xf32>,
    } else {
    }
    %c0_107 = arith.constant 0 : index
    %c0_108 = arith.constant 0 : index
    %113 = vector.load %arg6[%c0_107, %c0_108] : memref<2x128xf32, #tpu.memory_space<vmem>>, vector<1x128xf32>
    %cst_109 = arith.constant dense<0.000000e+00> : vector<128xf32>
    %114 = vector.multi_reduction <add>, %103, %cst_109 [0] : vector<128x128xf32> to vector<128xf32>
    %115 = vector.shape_cast %114 : vector<128xf32> to vector<1x128xf32>
    %116 = arith.addf %113, %115 : vector<1x128xf32>
    %c0_110 = arith.constant 0 : index
    %c0_111 = arith.constant 0 : index
    %117 = vector.load %arg6[%c0_110, %c0_111] : memref<2x128xf32, #tpu.memory_space<vmem>>, vector<1x128xf32>
    tpu.vector_store %arg6[%c0_110, %c0_111], %116 {strides = array<i32>} : memref<2x128xf32, #tpu.memory_space<vmem>>, vector<1x128xf32>,
    %c1_112 = arith.constant 1 : index
    %c0_113 = arith.constant 0 : index
    %118 = vector.load %arg6[%c1_112, %c0_113] : memref<2x128xf32, #tpu.memory_space<vmem>>, vector<1x128xf32>
    %119 = arith.mulf %103, %103 : vector<128x128xf32>
    %cst_114 = arith.constant dense<0.000000e+00> : vector<128xf32>
    %120 = vector.multi_reduction <add>, %119, %cst_114 [0] : vector<128x128xf32> to vector<128xf32>
    %121 = vector.shape_cast %120 : vector<128xf32> to vector<1x128xf32>
    %122 = arith.addf %118, %121 : vector<1x128xf32>
    %c1_115 = arith.constant 1 : index
    %c0_116 = arith.constant 0 : index
    %123 = vector.load %arg6[%c1_115, %c0_116] : memref<2x128xf32, #tpu.memory_space<vmem>>, vector<1x128xf32>
    tpu.vector_store %arg6[%c1_115, %c0_116], %122 {strides = array<i32>} : memref<2x128xf32, #tpu.memory_space<vmem>>, vector<1x128xf32>,
    return
  }
  func.func @transform_0(%arg0: i32, %arg1: i32, %arg2: i32) -> (i32, i32, i32, i32) {
    %c0_i32 = arith.constant 0 : i32
    %c0_i32_0 = arith.constant 0 : i32
    %c0_i32_1 = arith.constant 0 : i32
    %c0_i32_2 = arith.constant 0 : i32
    return %arg1, %c0_i32, %c0_i32_0, %c0_i32_1 : i32, i32, i32, i32
  }
  func.func @transform_1(%arg0: i32, %arg1: i32, %arg2: i32) -> (i32, i32, i32) {
    %c0_i32 = arith.constant 0 : i32
    %c0_i32_0 = arith.constant 0 : i32
    %c0_i32_1 = arith.constant 0 : i32
    return %c0_i32, %c0_i32_0, %arg0 : i32, i32, i32
  }
  func.func @transform_2(%arg0: i32, %arg1: i32, %arg2: i32) -> (i32, i32, i32, i32) {
    %c0_i32 = arith.constant 0 : i32
    %c0_i32_0 = arith.constant 0 : i32
    return %arg1, %arg2, %c0_i32, %arg0 : i32, i32, i32, i32
  }
  func.func @transform_3(%arg0: i32, %arg1: i32, %arg2: i32) -> (i32, i32) {
    %c0_i32 = arith.constant 0 : i32
    %c0_i32_0 = arith.constant 0 : i32
    return %c0_i32, %arg0 : i32, i32
  }
}

module attributes {stable_mosaic.version = 11 : i64} {
  func.func @_bn_apply_kernel(%arg0: i32, %arg1: i32, %arg2: i32, %arg3: memref<2x128xf32, #tpu.memory_space<vmem>>, %arg4: memref<1x128xf32, #tpu.memory_space<vmem>>, %arg5: memref<1x128xf32, #tpu.memory_space<vmem>>, %arg6: memref<1x8x16x128xf32, #tpu.memory_space<vmem>>, %arg7: memref<1x8x16x128xf32, #tpu.memory_space<vmem>>) attributes {dimension_semantics = [#tpu.dimension_semantics<parallel>, #tpu.dimension_semantics<parallel>, #tpu.dimension_semantics<parallel>], iteration_bounds = array<i64: 1, 2, 2>, scalar_prefetch = 0 : i64, scratch_operands = 0 : i64, tpu.core_type = #tpu.core_type<tc>, window_params = [{transform_indices = @transform_0, window_bounds = array<i64: 2, 128>}, {transform_indices = @transform_1, window_bounds = array<i64: 1, 128>}, {transform_indices = @transform_2, window_bounds = array<i64: 1, 128>}, {transform_indices = @transform_3, window_bounds = array<i64: 1, 8, 16, 128>}, {transform_indices = @transform_4, window_bounds = array<i64: 1, 8, 16, 128>}]} {
    %c0 = arith.constant 0 : index
    %c0_0 = arith.constant 0 : index
    %0 = vector.load %arg3[%c0, %c0_0] : memref<2x128xf32, #tpu.memory_space<vmem>>, vector<1x128xf32>
    %cst = arith.constant 0.001953125 : f32
    %1 = vector.broadcast %cst : f32 to vector<1x128xf32>
    %2 = arith.mulf %0, %1 : vector<1x128xf32>
    %c1 = arith.constant 1 : index
    %c0_1 = arith.constant 0 : index
    %3 = vector.load %arg3[%c1, %c0_1] : memref<2x128xf32, #tpu.memory_space<vmem>>, vector<1x128xf32>
    %cst_2 = arith.constant 0.001953125 : f32
    %4 = vector.broadcast %cst_2 : f32 to vector<1x128xf32>
    %5 = arith.mulf %3, %4 : vector<1x128xf32>
    %6 = arith.mulf %2, %2 : vector<1x128xf32>
    %7 = arith.subf %5, %6 : vector<1x128xf32>
    %c0_3 = arith.constant 0 : index
    %c0_4 = arith.constant 0 : index
    %8 = vector.load %arg4[%c0_3, %c0_4] : memref<1x128xf32, #tpu.memory_space<vmem>>, vector<1x128xf32>
    %cst_5 = arith.constant 9.99999974E-6 : f32
    %9 = vector.broadcast %cst_5 : f32 to vector<1x128xf32>
    %10 = arith.addf %7, %9 : vector<1x128xf32>
    %11 = math.rsqrt %10 : vector<1x128xf32>
    %12 = arith.mulf %8, %11 : vector<1x128xf32>
    %c0_6 = arith.constant 0 : index
    %c0_7 = arith.constant 0 : index
    %13 = vector.load %arg5[%c0_6, %c0_7] : memref<1x128xf32, #tpu.memory_space<vmem>>, vector<1x128xf32>
    %14 = arith.mulf %2, %12 : vector<1x128xf32>
    %15 = arith.subf %13, %14 : vector<1x128xf32>
    %c0_8 = arith.constant 0 : index
    %c0_9 = arith.constant 0 : index
    %c0_10 = arith.constant 0 : index
    %c0_11 = arith.constant 0 : index
    %16 = vector.load %arg6[%c0_8, %c0_9, %c0_10, %c0_11] : memref<1x8x16x128xf32, #tpu.memory_space<vmem>>, vector<1x8x16x128xf32>
    %17 = vector.shape_cast %12 : vector<1x128xf32> to vector<1x1x1x128xf32>
    %18 = vector.broadcast %17 : vector<1x1x1x128xf32> to vector<1x8x16x128xf32>
    %19 = arith.mulf %16, %18 : vector<1x8x16x128xf32>
    %20 = vector.shape_cast %15 : vector<1x128xf32> to vector<1x1x1x128xf32>
    %21 = vector.broadcast %20 : vector<1x1x1x128xf32> to vector<1x8x16x128xf32>
    %22 = arith.addf %19, %21 : vector<1x8x16x128xf32>
    %cst_12 = arith.constant 0.00999999977 : f32
    %23 = vector.broadcast %cst_12 : f32 to vector<1x8x16x128xf32>
    %24 = arith.mulf %23, %22 : vector<1x8x16x128xf32>
    %25 = arith.maximumf %22, %24 : vector<1x8x16x128xf32>
    %c0_13 = arith.constant 0 : index
    %c0_14 = arith.constant 0 : index
    %c0_15 = arith.constant 0 : index
    %c0_16 = arith.constant 0 : index
    %26 = vector.load %arg7[%c0_13, %c0_14, %c0_15, %c0_16] : memref<1x8x16x128xf32, #tpu.memory_space<vmem>>, vector<1x8x16x128xf32>
    tpu.vector_store %arg7[%c0_13, %c0_14, %c0_15, %c0_16], %25 {strides = array<i32>} : memref<1x8x16x128xf32, #tpu.memory_space<vmem>>, vector<1x8x16x128xf32>,
    return
  }
  func.func @transform_0(%arg0: i32, %arg1: i32, %arg2: i32) -> (i32, i32) {
    %c0_i32 = arith.constant 0 : i32
    %c0_i32_0 = arith.constant 0 : i32
    return %c0_i32, %arg0 : i32, i32
  }
  func.func @transform_1(%arg0: i32, %arg1: i32, %arg2: i32) -> (i32, i32) {
    %c0_i32 = arith.constant 0 : i32
    %c0_i32_0 = arith.constant 0 : i32
    return %c0_i32, %arg0 : i32, i32
  }
  func.func @transform_2(%arg0: i32, %arg1: i32, %arg2: i32) -> (i32, i32) {
    %c0_i32 = arith.constant 0 : i32
    %c0_i32_0 = arith.constant 0 : i32
    return %c0_i32, %arg0 : i32, i32
  }
  func.func @transform_3(%arg0: i32, %arg1: i32, %arg2: i32) -> (i32, i32, i32, i32) {
    %c0_i32 = arith.constant 0 : i32
    %c0_i32_0 = arith.constant 0 : i32
    return %arg1, %arg2, %c0_i32, %arg0 : i32, i32, i32, i32
  }
  func.func @transform_4(%arg0: i32, %arg1: i32, %arg2: i32) -> (i32, i32, i32, i32) {
    %c0_i32 = arith.constant 0 : i32
    %c0_i32_0 = arith.constant 0 : i32
    return %arg1, %arg2, %c0_i32, %arg0 : i32, i32, i32, i32
  }
}

</mosaic_0001>

<llo_original>
// kernel: conv_bn_forward.3
$region0: #{conv_bn_forward.3}
  #allocation0 [shape = 'u32[]', space=smem, size = 0x4, offset = 0x4, fixed_abs, tag = 'smem constant byte address 0x4 - core index']
  #allocation1 [shape = 'u32[72,128]{1,0:T(1,128)}', space=vmem, size = 0x9000, scoped, tag = 'internal scratch']
  %s0 = inlined_call_operand.vmem [shape: f32[2,128], index: 0, kind: input, shape index: {}]
  %s1 = inlined_call_operand.vmem [shape: f32[1,128], index: 1, kind: input, shape index: {}]
  %s2 = inlined_call_operand.vmem [shape: f32[1,128], index: 2, kind: input, shape index: {}]
  %s3 = inlined_call_operand.vmem [shape: f32[2,16,16,128], index: 3, kind: input, shape index: {}, may-alias: {3,4}]
  %s4 = inlined_call_operand.vmem [shape: f32[2,16,16,128], index: 4, kind: output, shape index: {}, may-alias: {3,4}]
  %s5 = sld [smem:[#allocation0]]
  $region49: #{conv_bn_forward.3} parent=0
    _
  %s7 = ssub.s32 1, %s5
  %s8 = scalar_select 0, %s7, %s5
  loop: start=0, step=1, limit=6
  $region2: #{conv_bn_forward.3} parent=0 // loop_pre_header
    _
  $region3: #{conv_bn_forward.3} parent=0 // loop_header
    %s10 = sphi 0, %s14
    %p11 = scmp.ge.s32.totalorder %s10, 6
    %s17 = sphi 0, %s36
    %s18 = sphi 0, %s32
    %s19 = sphi 0, %s28
    %s20 = sphi 0, %s17
    %s21 = sphi 0, %s18
    %s22 = sphi 0, %s19
    %s23 = sphi 0, %s20
    %s24 = sphi 0, %s21
    %s25 = sphi 0, %s22
    %s39 = sphi 0, %s41
    %s42 = sphi 0, %s39
    %s43 = sphi 0, %s42
    %s59 = sphi 0, %s43
    %s65 = sphi 0, %s67
    %s68 = sphi 0, %s65
    %s69 = sphi 0, %s68
    %s85 = sphi 0, %s69
    %s91 = sphi 0, %s93
    %s94 = sphi 0, %s91
    %s95 = sphi 0, %s94
    %s111 = sphi 0, %s95
    %s121 = sphi 0, %s123
    %s124 = sphi 0, %s121
    %s125 = sphi 0, %s124
    %s141 = sphi 0, %s125
    %s151 = sphi 0, %s153
    %s154 = sphi 0, %s151
    %s155 = sphi 0, %s154
    %s171 = sphi 0, %s155
  $region4: #{conv_bn_forward.3} parent=0 // loop_header_branch
    %13 = sbr.rel (%p11) target = $region8
  $region5: #{conv_bn_forward.3} parent=0 // loop_body
    %s15 = ssub.s32 %s10, 1
    %s16 = ssub.s32 %s10, 2
    %s26 = sadd.s32 1, %s19
    %p27 = scmp.ge.s32.totalorder %s26, 2
    %s28 = scalar_select %p27, 0, %s26
    %s29 = sadd.s32 1, %s18
    %s30 = scalar_select %p27, %s29, %s18
    %p31 = scmp.ge.s32.totalorder %s30, 2
    %s32 = scalar_select %p31, 0, %s30
    %s33 = sadd.s32 1, %s17
    %s34 = scalar_select %p31, %s33, %s17
    %p35 = scmp.ge.s32.totalorder %s34, 1
    %s36 = scalar_select %p35, 0, %s34
    %s37 = ssub.s32 %s17, %s36
    %p38 = scmp.eq.s32.totalorder %s37, 0
    %s40 = sadd.s32 %s39, 1
    %s41 = scalar_select %p38, %s39, %s40
    %p44 = pneg %p38
    %p45 = scmp.eq.s32.totalorder %s10, 3
    %p46 = por %p44, %p45
    %p47 = scmp.ne.s32.totalorder %s39, %s42
    %p48 = scmp.eq.s32.totalorder %s10, 0
    %p49 = por %p47, %p48
    %p50 = scmp.ne.s32.totalorder %s39, %s42
    %p51 = scmp.eq.s32.totalorder %s15, 3
    %p52 = por %p50, %p51
    %p53 = scmp.ne.s32.totalorder %s42, %s43
    %p54 = scmp.eq.s32.totalorder %s15, 0
    %p55 = por %p53, %p54
    %p56 = scmp.ne.s32.totalorder %s42, %s43
    %p57 = scmp.eq.s32.totalorder %s16, 3
    %p58 = por %p56, %p57
    %p60 = scmp.ne.s32.totalorder %s43, %s59
    %p61 = scmp.eq.s32.totalorder %s16, 0
    %p62 = por %p60, %p61
    %s63 = ssub.s32 %s17, %s36
    %p64 = scmp.eq.s32.totalorder %s63, 0
    %s66 = sadd.s32 %s65, 1
    %s67 = scalar_select %p64, %s65, %s66
    %p70 = pneg %p64
    %p71 = scmp.eq.s32.totalorder %s10, 3
    %p72 = por %p70, %p71
    %p73 = scmp.ne.s32.totalorder %s65, %s68
    %p74 = scmp.eq.s32.totalorder %s10, 0
    %p75 = por %p73, %p74
    %p76 = scmp.ne.s32.totalorder %s65, %s68
    %p77 = scmp.eq.s32.totalorder %s15, 3
    %p78 = por %p76, %p77
    %p79 = scmp.ne.s32.totalorder %s68, %s69
    %p80 = scmp.eq.s32.totalorder %s15, 0
    %p81 = por %p79, %p80
    %p82 = scmp.ne.s32.totalorder %s68, %s69
    %p83 = scmp.eq.s32.totalorder %s16, 3
    %p84 = por %p82, %p83
    %p86 = scmp.ne.s32.totalorder %s69, %s85
    %p87 = scmp.eq.s32.totalorder %s16, 0
    %p88 = por %p86, %p87
    %s89 = ssub.s32 %s17, %s36
    %p90 = scmp.eq.s32.totalorder %s89, 0
    %s92 = sadd.s32 %s91, 1
    %s93 = scalar_select %p90, %s91, %s92
    %p96 = pneg %p90
    %p97 = scmp.eq.s32.totalorder %s10, 3
    %p98 = por %p96, %p97
    %p99 = scmp.ne.s32.totalorder %s91, %s94
    %p100 = scmp.eq.s32.totalorder %s10, 0
    %p101 = por %p99, %p100
    %p102 = scmp.ne.s32.totalorder %s91, %s94
    %p103 = scmp.eq.s32.totalorder %s15, 3
    %p104 = por %p102, %p103
    %p105 = scmp.ne.s32.totalorder %s94, %s95
    %p106 = scmp.eq.s32.totalorder %s15, 0
    %p107 = por %p105, %p106
    %p108 = scmp.ne.s32.totalorder %s94, %s95
    %p109 = scmp.eq.s32.totalorder %s16, 3
    %p110 = por %p108, %p109
    %p112 = scmp.ne.s32.totalorder %s95, %s111
    %p113 = scmp.eq.s32.totalorder %s16, 0
    %p114 = por %p112, %p113
    %s115 = ssub.s32 %s18, %s32
    %s116 = ssub.s32 %s19, %s28
    %s117 = sor.u32 %s115, %s116
    %s118 = ssub.s32 %s17, %s36
    %s119 = sor.u32 %s117, %s118
    %p120 = scmp.eq.s32.totalorder %s119, 0
    %s122 = sadd.s32 %s121, 1
    %s123 = scalar_select %p120, %s121, %s122
    %p126 = pneg %p120
    %p127 = scmp.eq.s32.totalorder %s10, 3
    %p128 = por %p126, %p127
    %p129 = scmp.ne.s32.totalorder %s121, %s124
    %p130 = scmp.eq.s32.totalorder %s10, 0
    %p131 = por %p129, %p130
    %p132 = scmp.ne.s32.totalorder %s121, %s124
    %p133 = scmp.eq.s32.totalorder %s15, 3
    %p134 = por %p132, %p133
    %p135 = scmp.ne.s32.totalorder %s124, %s125
    %p136 = scmp.eq.s32.totalorder %s15, 0
    %p137 = por %p135, %p136
    %p138 = scmp.ne.s32.totalorder %s124, %s125
    %p139 = scmp.eq.s32.totalorder %s16, 3
    %p140 = por %p138, %p139
    %p142 = scmp.ne.s32.totalorder %s125, %s141
    %p143 = scmp.eq.s32.totalorder %s16, 0
    %p144 = por %p142, %p143
    %s145 = ssub.s32 %s18, %s32
    %s146 = ssub.s32 %s19, %s28
    %s147 = sor.u32 %s145, %s146
    %s148 = ssub.s32 %s17, %s36
    %s149 = sor.u32 %s147, %s148
    %p150 = scmp.eq.s32.totalorder %s149, 0
    %s152 = sadd.s32 %s151, 1
    %s153 = scalar_select %p150, %s151, %s152
    %p156 = pneg %p150
    %p157 = scmp.eq.s32.totalorder %s10, 3
    %p158 = por %p156, %p157
    %p159 = scmp.ne.s32.totalorder %s151, %s154
    %p160 = scmp.eq.s32.totalorder %s10, 0
    %p161 = por %p159, %p160
    %p162 = scmp.ne.s32.totalorder %s151, %s154
    %p163 = scmp.eq.s32.totalorder %s15, 3
    %p164 = por %p162, %p163
    %p165 = scmp.ne.s32.totalorder %s154, %s155
    %p166 = scmp.eq.s32.totalorder %s15, 0
    %p167 = por %p165, %p166
    %p168 = scmp.ne.s32.totalorder %s154, %s155
    %p169 = scmp.eq.s32.totalorder %s16, 3
    %p170 = por %p168, %p169
    %p172 = scmp.ne.s32.totalorder %s155, %s171
    %p173 = scmp.eq.s32.totalorder %s16, 0
    %p174 = por %p172, %p173
    %p175 = scmp.le.s32.totalorder 1, %s10
    %p176 = scmp.lt.s32.totalorder %s10, 5
    %p177 = pnand %p175, %p176
    %p178 = pneg %p177
    // Predicated region
    $region9: #{conv_bn_forward.3} parent=5 // pred_check
      _
    $region10: #{conv_bn_forward.3} parent=5 // pred_check_branch
      %180 = sbr.rel (%p177) target = $region12
    $region11: #{conv_bn_forward.3} parent=5 // pred_region
      %s181 = ssub.s32 %s10, 1
      // Predicated region
      $region13: #{conv_bn_forward.3} parent=11 // pred_check
        %p182 = pneg %p55
      $region14: #{conv_bn_forward.3} parent=11 // pred_check_branch
        %184 = sbr.rel (%p182) target = $region16
      $region15: #{conv_bn_forward.3} parent=11 // pred_region
        %p185 = scmp.lt.s32.totalorder %s20, 0
        %s186 = scalar_select %p185, %s20, 0
        %s187 = smul.addr %s186, 2
        %s188 = scalar_lea.vmem %s0, %s187
      $region16: #{conv_bn_forward.3} parent=11 // pred_fallthru
        _
      // Predicated region
      $region17: #{conv_bn_forward.3} parent=11 // pred_check
        %p189 = pneg %p81
      $region18: #{conv_bn_forward.3} parent=11 // pred_check_branch
        %191 = sbr.rel (%p189) target = $region20
      $region19: #{conv_bn_forward.3} parent=11 // pred_region
        %p192 = scmp.lt.s32.totalorder %s20, 0
        %s193 = scalar_select %p192, %s20, 0
        %s194 = scalar_lea.vmem %s1, %s193
      $region20: #{conv_bn_forward.3} parent=11 // pred_fallthru
        _
      // Predicated region
      $region21: #{conv_bn_forward.3} parent=11 // pred_check
        %p195 = pneg %p107
      $region22: #{conv_bn_forward.3} parent=11 // pred_check_branch
        %197 = sbr.rel (%p195) target = $region24
      $region23: #{conv_bn_forward.3} parent=11 // pred_region
        %p198 = scmp.lt.s32.totalorder %s20, 0
        %s199 = scalar_select %p198, %s20, 0
        %s200 = scalar_lea.vmem %s2, %s199
      $region24: #{conv_bn_forward.3} parent=11 // pred_fallthru
        _
    $region12: #{conv_bn_forward.3} parent=5 // pred_fallthru
      _
    %p201 = scmp.lt.s32.totalorder %s10, 4
    // Predicated region
    $region25: #{conv_bn_forward.3} parent=5 // pred_check
      %p202 = pneg %p201
    $region26: #{conv_bn_forward.3} parent=5 // pred_check_branch
      %204 = sbr.rel (%p202) target = $region28
    $region27: #{conv_bn_forward.3} parent=5 // pred_region
      // Predicated region
      $region29: #{conv_bn_forward.3} parent=27 // pred_check
        %p205 = pneg %p131
      $region30: #{conv_bn_forward.3} parent=27 // pred_check_branch
        %207 = sbr.rel (%p205) target = $region32
      $region31: #{conv_bn_forward.3} parent=27 // pred_region
        %s208 = smul.u32 8, %s19
        %p209 = scmp.lt.s32.totalorder %s18, 1
        %s210 = scalar_select %p209, %s18, 1
        %p211 = scmp.lt.s32.totalorder %s208, 15
        %s212 = scalar_select %p211, %s208, 15
        %p213 = scmp.lt.s32.totalorder %s17, 0
        %s214 = scalar_select %p213, %s17, 0
        %s215 = smul.addr %s212, 2
        %s216 = sadd.s32 %s214, %s215
        %s217 = smul.addr %s210, 32
        %s218 = sadd.s32 %s216, %s217
        %s219 = smul.addr %s218, 8
        %s220 = scalar_lea.vmem %s3, %s219
        %s221 = smul.u32 8, %s19
      $region32: #{conv_bn_forward.3} parent=27 // pred_fallthru
        _
    $region28: #{conv_bn_forward.3} parent=5 // pred_fallthru
      _
    %p222 = scmp.le.s32.totalorder 1, %s10
    %p223 = scmp.lt.s32.totalorder %s10, 5
    %p224 = pnand %p222, %p223
    %p225 = pneg %p224
    // Predicated region
    $region33: #{conv_bn_forward.3} parent=5 // pred_check
      _
    $region34: #{conv_bn_forward.3} parent=5 // pred_check_branch
      %227 = sbr.rel (%p224) target = $region36
    $region35: #{conv_bn_forward.3} parent=5 // pred_region
      %s228 = ssub.s32 %s10, 1
      %p229 = scmp.lt.s32.totalorder %s20, 0
      %s230 = scalar_select %p229, %s20, 0
      %s231 = smul.addr %s230, 2
      %s232 = scalar_lea.vmem %s0, %s231
      %p233 = pneg %p55
      %p234 = pneg %p52
      %p235 = scmp.lt.s32.totalorder %s20, 0
      %s236 = scalar_select %p235, %s20, 0
      %s237 = scalar_lea.vmem %s1, %s236
      %p238 = pneg %p81
      %p239 = pneg %p78
      %p240 = scmp.lt.s32.totalorder %s20, 0
      %s241 = scalar_select %p240, %s20, 0
      %s242 = scalar_lea.vmem %s2, %s241
      %p243 = pneg %p107
      %p244 = pneg %p104
      %s245 = smul.u32 8, %s22
      %p246 = scmp.lt.s32.totalorder %s21, 1
      %s247 = scalar_select %p246, %s21, 1
      %p248 = scmp.lt.s32.totalorder %s245, 15
      %s249 = scalar_select %p248, %s245, 15
      %p250 = scmp.lt.s32.totalorder %s20, 0
      %s251 = scalar_select %p250, %s20, 0
      %s252 = smul.addr %s249, 2
      %s253 = sadd.s32 %s251, %s252
      %s254 = smul.addr %s247, 32
      %s255 = sadd.s32 %s253, %s254
      %s256 = smul.addr %s255, 8
      %s257 = scalar_lea.vmem %s3, %s256
      %p258 = pneg %p137
      %p259 = pneg %p134
      %p260 = pneg %p167
      %p261 = pneg %p164
      %s262 = smul.u32 8, %s22
      %p263 = scmp.lt.s32.totalorder %s21, 1
      %s264 = scalar_select %p263, %s21, 1
      %p265 = scmp.lt.s32.totalorder %s262, 15
      %s266 = scalar_select %p265, %s262, 15
      %p267 = scmp.lt.s32.totalorder %s20, 0
      %s268 = scalar_select %p267, %s20, 0
      %s269 = smul.addr %s266, 2
      %s270 = sadd.s32 %s268, %s269
      %s271 = smul.addr %s264, 32
      %s272 = sadd.s32 %s270, %s271
      %s273 = smul.addr %s272, 8
      %s274 = scalar_lea.vmem %s4, %s273
      %p275 = scmp.lt.s32.totalorder %s20, 0
      %s276 = scalar_select %p275, %s20, 0
      %s277 = smul.addr %s276, 2
      %s278 = scalar_lea.vmem %s0, %s277
      %p279 = scmp.lt.s32.totalorder %s20, 0
      %s280 = scalar_select %p279, %s20, 0
      %s281 = scalar_lea.vmem %s1, %s280
      %p282 = scmp.lt.s32.totalorder %s20, 0
      %s283 = scalar_select %p282, %s20, 0
      %s284 = scalar_lea.vmem %s2, %s283
      %s285 = smul.u32 8, %s22
      %p286 = scmp.lt.s32.totalorder %s21, 1
      %s287 = scalar_select %p286, %s21, 1
      %p288 = scmp.lt.s32.totalorder %s285, 15
      %s289 = scalar_select %p288, %s285, 15
      %p290 = scmp.lt.s32.totalorder %s20, 0
      %s291 = scalar_select %p290, %s20, 0
      %s292 = smul.addr %s289, 2
      %s293 = sadd.s32 %s291, %s292
      %s294 = smul.addr %s287, 32
      %s295 = sadd.s32 %s293, %s294
      %s296 = smul.addr %s295, 8
      %s297 = scalar_lea.vmem %s3, %s296
      %s298 = smul.u32 8, %s22
      %s299 = smul.u32 8, %s22
      %p300 = scmp.lt.s32.totalorder %s21, 1
      %s301 = scalar_select %p300, %s21, 1
      %p302 = scmp.lt.s32.totalorder %s299, 15
      %s303 = scalar_select %p302, %s299, 15
      %p304 = scmp.lt.s32.totalorder %s20, 0
      %s305 = scalar_select %p304, %s20, 0
      %s306 = smul.addr %s303, 2
      %s307 = sadd.s32 %s305, %s306
      %s308 = smul.addr %s301, 32
      %s309 = sadd.s32 %s307, %s308
      %s310 = smul.addr %s309, 8
      %s311 = scalar_lea.vmem %s4, %s310
      %s312 = smul.u32 8, %s22
      %v313 = vld [vmem:[%s278] sm:$0x1]
      %v314 = vmul.f32 %v313, 0.001953125
      %v315 = vld [vmem:[%s278 + $0x1] sm:$0x1]
      %v316 = vmul.f32 %v315, 0.001953125
      %v317 = vmul.f32 %v314, %v314
      %v318 = vsub.f32 %v316, %v317
      %v319 = vld [vmem:[%s281] sm:$0x1]
      %v320 = vadd.f32 %v318, 1e-05
      %v321 = vrsqrt.pop %v320
      %v322 = vmul.f32 %v321, %v320
      %v323 = vmul.f32 %v322, %v321
      %v324 = vmul.f32 0.5, %v323
      %v325 = vsub.f32 1.5, %v324
      %v326 = vmul.f32 %v321, %v325
      %vm327 = vweird.f32 %v320
      %vm328 = vweird.f32 %v321
      %vm329 = vmor %vm327, %vm328
      %v330 = vsel %vm329, %v321, %v326
      %v331 = vmul.f32 %v319, %v330
      %v332 = vld [vmem:[%s284] sm:$0x1]
      %v333 = vmul.f32 %v314, %v331
      %v334 = vsub.f32 %v332, %v333
      %v335 = vld [vmem:[%s297] sm:$0xff]
      %v336 = vld [vmem:[%s297 + $0x8] sm:$0xff]
      %v337 = vld [vmem:[%s297 + $0x10] sm:$0xff]
      %v338 = vld [vmem:[%s297 + $0x18] sm:$0xff]
      %v339 = vld [vmem:[%s297 + $0x20] sm:$0xff]
      %v340 = vld [vmem:[%s297 + $0x28] sm:$0xff]
      %v341 = vld [vmem:[%s297 + $0x30] sm:$0xff]
      %v342 = vld [vmem:[%s297 + $0x38] sm:$0xff]
      %v343 = vld [vmem:[%s297 + $0x40] sm:$0xff]
      %v344 = vld [vmem:[%s297 + $0x48] sm:$0xff]
      %v345 = vld [vmem:[%s297 + $0x50] sm:$0xff]
      %v346 = vld [vmem:[%s297 + $0x58] sm:$0xff]
      %v347 = vld [vmem:[%s297 + $0x60] sm:$0xff]
      %v348 = vld [vmem:[%s297 + $0x68] sm:$0xff]
      %v349 = vld [vmem:[%s297 + $0x70] sm:$0xff]
      %v350 = vld [vmem:[%s297 + $0x78] sm:$0xff]
      %v352 = vperm.slane %v331, 0
      %v354 = vmul.f32 %v335, %v352
      %v355 = vmul.f32 %v336, %v352
      %v356 = vmul.f32 %v337, %v352
      %v357 = vmul.f32 %v338, %v352
      %v358 = vmul.f32 %v339, %v352
      %v359 = vmul.f32 %v340, %v352
      %v360 = vmul.f32 %v341, %v352
      %v361 = vmul.f32 %v342, %v352
      %v362 = vmul.f32 %v343, %v352
      %v363 = vmul.f32 %v344, %v352
      %v364 = vmul.f32 %v345, %v352
      %v365 = vmul.f32 %v346, %v352
      %v366 = vmul.f32 %v347, %v352
      %v367 = vmul.f32 %v348, %v352
      %v368 = vmul.f32 %v349, %v352
      %v369 = vmul.f32 %v350, %v352
      %v371 = vperm.slane %v334, 0
      %v373 = vadd.f32 %v354, %v371
      %v374 = vadd.f32 %v355, %v371
      %v375 = vadd.f32 %v356, %v371
      %v376 = vadd.f32 %v357, %v371
      %v377 = vadd.f32 %v358, %v371
      %v378 = vadd.f32 %v359, %v371
      %v379 = vadd.f32 %v360, %v371
      %v380 = vadd.f32 %v361, %v371
      %v381 = vadd.f32 %v362, %v371
      %v382 = vadd.f32 %v363, %v371
      %v383 = vadd.f32 %v364, %v371
      %v384 = vadd.f32 %v365, %v371
      %v385 = vadd.f32 %v366, %v371
      %v386 = vadd.f32 %v367, %v371
      %v387 = vadd.f32 %v368, %v371
      %v388 = vadd.f32 %v369, %v371
      %v389 = vmul.f32 %v373, 0.01
      %v390 = vmul.f32 %v374, 0.01
      %v391 = vmul.f32 %v375, 0.01
      %v392 = vmul.f32 %v376, 0.01
      %v393 = vmul.f32 %v377, 0.01
      %v394 = vmul.f32 %v378, 0.01
      %v395 = vmul.f32 %v379, 0.01
      %v396 = vmul.f32 %v380, 0.01
      %v397 = vmul.f32 %v381, 0.01
      %v398 = vmul.f32 %v382, 0.01
      %v399 = vmul.f32 %v383, 0.01
      %v400 = vmul.f32 %v384, 0.01
      %v401 = vmul.f32 %v385, 0.01
      %v402 = vmul.f32 %v386, 0.01
      %v403 = vmul.f32 %v387, 0.01
      %v404 = vmul.f32 %v388, 0.01
      %v405 = vmax.f32 %v373, %v389
      %v406 = vmax.f32 %v374, %v390
      %v407 = vmax.f32 %v375, %v391
      %v408 = vmax.f32 %v376, %v392
      %v409 = vmax.f32 %v377, %v393
      %v410 = vmax.f32 %v378, %v394
      %v411 = vmax.f32 %v379, %v395
      %v412 = vmax.f32 %v380, %v396
      %v413 = vmax.f32 %v381, %v397
      %v414 = vmax.f32 %v382, %v398
      %v415 = vmax.f32 %v383, %v399
      %v416 = vmax.f32 %v384, %v400
      %v417 = vmax.f32 %v385, %v401
      %v418 = vmax.f32 %v386, %v402
      %v419 = vmax.f32 %v387, %v403
      %v420 = vmax.f32 %v388, %v404
      %421 = vst [vmem:[%s311] sm:$0xff] %v405
      %422 = vst [vmem:[%s311 + $0x8] sm:$0xff] %v406
      %423 = vst [vmem:[%s311 + $0x10] sm:$0xff] %v407
      %424 = vst [vmem:[%s311 + $0x18] sm:$0xff] %v408
      %425 = vst [vmem:[%s311 + $0x20] sm:$0xff] %v409
      %426 = vst [vmem:[%s311 + $0x28] sm:$0xff] %v410
      %427 = vst [vmem:[%s311 + $0x30] sm:$0xff] %v411
      %428 = vst [vmem:[%s311 + $0x38] sm:$0xff] %v412
      %429 = vst [vmem:[%s311 + $0x40] sm:$0xff] %v413
      %430 = vst [vmem:[%s311 + $0x48] sm:$0xff] %v414
      %431 = vst [vmem:[%s311 + $0x50] sm:$0xff] %v415
      %432 = vst [vmem:[%s311 + $0x58] sm:$0xff] %v416
      %433 = vst [vmem:[%s311 + $0x60] sm:$0xff] %v417
      %434 = vst [vmem:[%s311 + $0x68] sm:$0xff] %v418
      %435 = vst [vmem:[%s311 + $0x70] sm:$0xff] %v419
      %436 = vst [vmem:[%s311 + $0x78] sm:$0xff] %v420
      %s437 = smul.u32 8, %s22
      %p438 = scmp.lt.s32.totalorder %s21, 1
      %s439 = scalar_select %p438, %s21, 1
      %p440 = scmp.lt.s32.totalorder %s437, 15
      %s441 = scalar_select %p440, %s437, 15
      %p442 = scmp.lt.s32.totalorder %s20, 0
      %s443 = scalar_select %p442, %s20, 0
      %s444 = smul.addr %s441, 2
      %s445 = sadd.s32 %s443, %s444
      %s446 = smul.addr %s439, 32
      %s447 = sadd.s32 %s445, %s446
      %s448 = smul.addr %s447, 8
      %s449 = scalar_lea.vmem %s4, %s448
      // Predicated region
      $region37: #{conv_bn_forward.3} parent=35 // pred_check
        %p450 = pneg %p164
      $region38: #{conv_bn_forward.3} parent=35 // pred_check_branch
        %452 = sbr.rel (%p450) target = $region40
      $region39: #{conv_bn_forward.3} parent=35 // pred_region
        %s453 = smul.u32 8, %s22
      $region40: #{conv_bn_forward.3} parent=35 // pred_fallthru
        _
    $region36: #{conv_bn_forward.3} parent=5 // pred_fallthru
      _
    %p454 = scmp.le.s32.totalorder 2, %s10
    // Predicated region
    $region41: #{conv_bn_forward.3} parent=5 // pred_check
      %p455 = pneg %p454
    $region42: #{conv_bn_forward.3} parent=5 // pred_check_branch
      %457 = sbr.rel (%p455) target = $region44
    $region43: #{conv_bn_forward.3} parent=5 // pred_region
      %s458 = ssub.s32 %s10, 2
      // Predicated region
      $region45: #{conv_bn_forward.3} parent=43 // pred_check
        %p459 = pneg %p170
      $region46: #{conv_bn_forward.3} parent=43 // pred_check_branch
        %461 = sbr.rel (%p459) target = $region48
      $region47: #{conv_bn_forward.3} parent=43 // pred_region
        %s462 = smul.u32 8, %s25
        %p463 = scmp.lt.s32.totalorder %s24, 1
        %s464 = scalar_select %p463, %s24, 1
        %p465 = scmp.lt.s32.totalorder %s462, 15
        %s466 = scalar_select %p465, %s462, 15
        %p467 = scmp.lt.s32.totalorder %s23, 0
        %s468 = scalar_select %p467, %s23, 0
        %s469 = smul.addr %s466, 2
        %s470 = sadd.s32 %s468, %s469
        %s471 = smul.addr %s464, 32
        %s472 = sadd.s32 %s470, %s471
        %s473 = smul.addr %s472, 8
        %s474 = scalar_lea.vmem %s4, %s473
      $region48: #{conv_bn_forward.3} parent=43 // pred_fallthru
        _
    $region44: #{conv_bn_forward.3} parent=5 // pred_fallthru
      _
  $region6: #{conv_bn_forward.3} parent=0 // loop_footer
    %s14 = sadd.s32 1, %s10
  $region7: #{conv_bn_forward.3} parent=0 // loop_footer_branch
    %9 = sbr.rel target = $region3
  $region8: #{conv_bn_forward.3} parent=0 // loop_exit
    _

// kernel: conv_bn_forward.2
$region0: #{conv_bn_forward.2}
  #allocation0 [shape = 'u32[]', space=smem, size = 0x4, offset = 0x4, fixed_abs, tag = 'smem constant byte address 0x4 - core index']
  #allocation1 [shape = 'u32[72,128]{1,0:T(1,128)}', space=vmem, size = 0x9000, scoped, tag = 'internal scratch']
  #allocation2 [shape = 'f32[128,128]{1,0:T(8,128)}', space=vmem, size = 0x10000, scoped, tag = 'scratch operand']
  %s0 = inlined_call_operand.vmem [shape: f32[2,18,18,128], index: 0, kind: input, shape index: {}]
  %s1 = inlined_call_operand.vmem [shape: f32[9,128,128], index: 1, kind: input, shape index: {}]
  %s2 = inlined_call_operand.vmem [shape: f32[2,16,16,128], index: 2, kind: output, shape index: {0}]
  %s3 = inlined_call_operand.vmem [shape: f32[2,128], index: 3, kind: output, shape index: {1}]
  %4 = xla_tuple %s2, %s3
  %s5 = sld [smem:[#allocation0]]
  $region53: #{conv_bn_forward.2} parent=0
    _
  %s7 = ssub.s32 1, %s5
  %s8 = scalar_select 0, %s7, %s5
  loop: start=0, step=1, limit=6
  $region2: #{conv_bn_forward.2} parent=0 // loop_pre_header
    _
  $region3: #{conv_bn_forward.2} parent=0 // loop_header
    %s10 = sphi 0, %s14
    %p11 = scmp.ge.s32.totalorder %s10, 6
    %s17 = sphi 0, %s36
    %s18 = sphi 0, %s32
    %s19 = sphi 0, %s28
    %s20 = sphi 0, %s17
    %s21 = sphi 0, %s18
    %s22 = sphi 0, %s19
    %s23 = sphi 0, %s20
    %s24 = sphi 0, %s21
    %s25 = sphi 0, %s22
    %s39 = sphi 0, %s41
    %s42 = sphi 0, %s39
    %s43 = sphi 0, %s42
    %s59 = sphi 0, %s43
    %s65 = sphi 0, %s67
    %s68 = sphi 0, %s65
    %s69 = sphi 0, %s68
    %s85 = sphi 0, %s69
    %s95 = sphi 0, %s97
    %s98 = sphi 0, %s95
    %s99 = sphi 0, %s98
    %s115 = sphi 0, %s99
    %s121 = sphi 0, %s123
    %s124 = sphi 0, %s121
    %s125 = sphi 0, %s124
    %s141 = sphi 0, %s125
  $region4: #{conv_bn_forward.2} parent=0 // loop_header_branch
    %13 = sbr.rel (%p11) target = $region8
  $region5: #{conv_bn_forward.2} parent=0 // loop_body
    %s15 = ssub.s32 %s10, 1
    %s16 = ssub.s32 %s10, 2
    %s26 = sadd.s32 1, %s19
    %p27 = scmp.ge.s32.totalorder %s26, 2
    %s28 = scalar_select %p27, 0, %s26
    %s29 = sadd.s32 1, %s18
    %s30 = scalar_select %p27, %s29, %s18
    %p31 = scmp.ge.s32.totalorder %s30, 2
    %s32 = scalar_select %p31, 0, %s30
    %s33 = sadd.s32 1, %s17
    %s34 = scalar_select %p31, %s33, %s17
    %p35 = scmp.ge.s32.totalorder %s34, 1
    %s36 = scalar_select %p35, 0, %s34
    %s37 = ssub.s32 %s18, %s32
    %p38 = scmp.eq.s32.totalorder %s37, 0
    %s40 = sadd.s32 %s39, 1
    %s41 = scalar_select %p38, %s39, %s40
    %p44 = pneg %p38
    %p45 = scmp.eq.s32.totalorder %s10, 3
    %p46 = por %p44, %p45
    %p47 = scmp.ne.s32.totalorder %s39, %s42
    %p48 = scmp.eq.s32.totalorder %s10, 0
    %p49 = por %p47, %p48
    %p50 = scmp.ne.s32.totalorder %s39, %s42
    %p51 = scmp.eq.s32.totalorder %s15, 3
    %p52 = por %p50, %p51
    %p53 = scmp.ne.s32.totalorder %s42, %s43
    %p54 = scmp.eq.s32.totalorder %s15, 0
    %p55 = por %p53, %p54
    %p56 = scmp.ne.s32.totalorder %s42, %s43
    %p57 = scmp.eq.s32.totalorder %s16, 3
    %p58 = por %p56, %p57
    %p60 = scmp.ne.s32.totalorder %s43, %s59
    %p61 = scmp.eq.s32.totalorder %s16, 0
    %p62 = por %p60, %p61
    %s63 = ssub.s32 %s17, %s36
    %p64 = scmp.eq.s32.totalorder %s63, 0
    %s66 = sadd.s32 %s65, 1
    %s67 = scalar_select %p64, %s65, %s66
    %p70 = pneg %p64
    %p71 = scmp.eq.s32.totalorder %s10, 3
    %p72 = por %p70, %p71
    %p73 = scmp.ne.s32.totalorder %s65, %s68
    %p74 = scmp.eq.s32.totalorder %s10, 0
    %p75 = por %p73, %p74
    %p76 = scmp.ne.s32.totalorder %s65, %s68
    %p77 = scmp.eq.s32.totalorder %s15, 3
    %p78 = por %p76, %p77
    %p79 = scmp.ne.s32.totalorder %s68, %s69
    %p80 = scmp.eq.s32.totalorder %s15, 0
    %p81 = por %p79, %p80
    %p82 = scmp.ne.s32.totalorder %s68, %s69
    %p83 = scmp.eq.s32.totalorder %s16, 3
    %p84 = por %p82, %p83
    %p86 = scmp.ne.s32.totalorder %s69, %s85
    %p87 = scmp.eq.s32.totalorder %s16, 0
    %p88 = por %p86, %p87
    %s89 = ssub.s32 %s18, %s32
    %s90 = ssub.s32 %s19, %s28
    %s91 = sor.u32 %s89, %s90
    %s92 = ssub.s32 %s17, %s36
    %s93 = sor.u32 %s91, %s92
    %p94 = scmp.eq.s32.totalorder %s93, 0
    %s96 = sadd.s32 %s95, 1
    %s97 = scalar_select %p94, %s95, %s96
    %p100 = pneg %p94
    %p101 = scmp.eq.s32.totalorder %s10, 3
    %p102 = por %p100, %p101
    %p103 = scmp.ne.s32.totalorder %s95, %s98
    %p104 = scmp.eq.s32.totalorder %s10, 0
    %p105 = por %p103, %p104
    %p106 = scmp.ne.s32.totalorder %s95, %s98
    %p107 = scmp.eq.s32.totalorder %s15, 3
    %p108 = por %p106, %p107
    %p109 = scmp.ne.s32.totalorder %s98, %s99
    %p110 = scmp.eq.s32.totalorder %s15, 0
    %p111 = por %p109, %p110
    %p112 = scmp.ne.s32.totalorder %s98, %s99
    %p113 = scmp.eq.s32.totalorder %s16, 3
    %p114 = por %p112, %p113
    %p116 = scmp.ne.s32.totalorder %s99, %s115
    %p117 = scmp.eq.s32.totalorder %s16, 0
    %p118 = por %p116, %p117
    %s119 = ssub.s32 %s17, %s36
    %p120 = scmp.eq.s32.totalorder %s119, 0
    %s122 = sadd.s32 %s121, 1
    %s123 = scalar_select %p120, %s121, %s122
    %p126 = pneg %p120
    %p127 = scmp.eq.s32.totalorder %s10, 3
    %p128 = por %p126, %p127
    %p129 = scmp.ne.s32.totalorder %s121, %s124
    %p130 = scmp.eq.s32.totalorder %s10, 0
    %p131 = por %p129, %p130
    %p132 = scmp.ne.s32.totalorder %s121, %s124
    %p133 = scmp.eq.s32.totalorder %s15, 3
    %p134 = por %p132, %p133
    %p135 = scmp.ne.s32.totalorder %s124, %s125
    %p136 = scmp.eq.s32.totalorder %s15, 0
    %p137 = por %p135, %p136
    %p138 = scmp.ne.s32.totalorder %s124, %s125
    %p139 = scmp.eq.s32.totalorder %s16, 3
    %p140 = por %p138, %p139
    %p142 = scmp.ne.s32.totalorder %s125, %s141
    %p143 = scmp.eq.s32.totalorder %s16, 0
    %p144 = por %p142, %p143
    %p145 = scmp.le.s32.totalorder 1, %s10
    %p146 = scmp.lt.s32.totalorder %s10, 5
    %p147 = pnand %p145, %p146
    %p148 = pneg %p147
    // Predicated region
    $region9: #{conv_bn_forward.2} parent=5 // pred_check
      _
    $region10: #{conv_bn_forward.2} parent=5 // pred_check_branch
      %150 = sbr.rel (%p147) target = $region12
    $region11: #{conv_bn_forward.2} parent=5 // pred_region
      %s151 = ssub.s32 %s10, 1
      // Predicated region
      $region13: #{conv_bn_forward.2} parent=11 // pred_check
        %p152 = pneg %p81
      $region14: #{conv_bn_forward.2} parent=11 // pred_check_branch
        %154 = sbr.rel (%p152) target = $region16
      $region15: #{conv_bn_forward.2} parent=11 // pred_region
        %p155 = scmp.lt.s32.totalorder %s20, 0
        %s156 = scalar_select %p155, %s20, 0
        %s157 = smul.addr %s156, 8
        %s158 = scalar_lea.vmem %s1, %s157
      $region16: #{conv_bn_forward.2} parent=11 // pred_fallthru
        _
    $region12: #{conv_bn_forward.2} parent=5 // pred_fallthru
      _
    %p159 = scmp.lt.s32.totalorder %s10, 4
    // Predicated region
    $region17: #{conv_bn_forward.2} parent=5 // pred_check
      %p160 = pneg %p159
    $region18: #{conv_bn_forward.2} parent=5 // pred_check_branch
      %162 = sbr.rel (%p160) target = $region20
    $region19: #{conv_bn_forward.2} parent=5 // pred_region
      // Predicated region
      $region21: #{conv_bn_forward.2} parent=19 // pred_check
        %p163 = pneg %p49
      $region22: #{conv_bn_forward.2} parent=19 // pred_check_branch
        %165 = sbr.rel (%p163) target = $region24
      $region23: #{conv_bn_forward.2} parent=19 // pred_region
        %p166 = scmp.lt.s32.totalorder %s18, 1
        %s167 = scalar_select %p166, %s18, 1
        %s168 = smul.addr %s167, 54
        %s169 = smul.addr %s168, 8
        %s170 = scalar_lea.vmem %s0, %s169
      $region24: #{conv_bn_forward.2} parent=19 // pred_fallthru
        _
    $region20: #{conv_bn_forward.2} parent=5 // pred_fallthru
      _
    %p171 = scmp.le.s32.totalorder 1, %s10
    %p172 = scmp.lt.s32.totalorder %s10, 5
    %p173 = pnand %p171, %p172
    %p174 = pneg %p173
    // Predicated region
    $region25: #{conv_bn_forward.2} parent=5 // pred_check
      _
    $region26: #{conv_bn_forward.2} parent=5 // pred_check_branch
      %176 = sbr.rel (%p173) target = $region28
    $region27: #{conv_bn_forward.2} parent=5 // pred_region
      %s177 = ssub.s32 %s10, 1
      %p178 = scmp.lt.s32.totalorder %s21, 1
      %s179 = scalar_select %p178, %s21, 1
      %s180 = smul.addr %s179, 54
      %s181 = smul.addr %s180, 8
      %s182 = scalar_lea.vmem %s0, %s181
      %p183 = pneg %p55
      %p184 = pneg %p52
      %p185 = scmp.lt.s32.totalorder %s20, 0
      %s186 = scalar_select %p185, %s20, 0
      %s187 = smul.addr %s186, 8
      %s188 = scalar_lea.vmem %s1, %s187
      %p189 = pneg %p81
      %p190 = pneg %p78
      %p191 = pneg %p111
      %p192 = pneg %p108
      %s193 = smul.u32 8, %s22
      %p194 = scmp.lt.s32.totalorder %s21, 1
      %s195 = scalar_select %p194, %s21, 1
      %p196 = scmp.lt.s32.totalorder %s193, 15
      %s197 = scalar_select %p196, %s193, 15
      %p198 = scmp.lt.s32.totalorder %s20, 0
      %s199 = scalar_select %p198, %s20, 0
      %s200 = smul.addr %s197, 2
      %s201 = sadd.s32 %s199, %s200
      %s202 = smul.addr %s195, 32
      %s203 = sadd.s32 %s201, %s202
      %s204 = smul.addr %s203, 8
      %s205 = scalar_lea.vmem %s2, %s204
      %p206 = pneg %p137
      %p207 = pneg %p134
      %p208 = scmp.lt.s32.totalorder %s20, 0
      %s209 = scalar_select %p208, %s20, 0
      %s210 = smul.addr %s209, 2
      %s211 = scalar_lea.vmem %s3, %s210
      %p212 = scmp.lt.s32.totalorder %s21, 1
      %s213 = scalar_select %p212, %s21, 1
      %s214 = smul.addr %s213, 54
      %s215 = smul.addr %s214, 8
      %s216 = scalar_lea.vmem %s0, %s215
      %p217 = scmp.lt.s32.totalorder %s20, 0
      %s218 = scalar_select %p217, %s20, 0
      %s219 = smul.addr %s218, 8
      %s220 = scalar_lea.vmem %s1, %s219
      %s221 = smul.u32 8, %s22
      %p222 = scmp.lt.s32.totalorder %s21, 1
      %s223 = scalar_select %p222, %s21, 1
      %p224 = scmp.lt.s32.totalorder %s221, 15
      %s225 = scalar_select %p224, %s221, 15
      %p226 = scmp.lt.s32.totalorder %s20, 0
      %s227 = scalar_select %p226, %s20, 0
      %s228 = smul.addr %s225, 2
      %s229 = sadd.s32 %s227, %s228
      %s230 = smul.addr %s223, 32
      %s231 = sadd.s32 %s229, %s230
      %s232 = smul.addr %s231, 8
      %s233 = scalar_lea.vmem %s2, %s232
      %s234 = smul.u32 8, %s22
      %p235 = scmp.lt.s32.totalorder %s20, 0
      %s236 = scalar_select %p235, %s20, 0
      %s237 = smul.addr %s236, 2
      %s238 = scalar_lea.vmem %s3, %s237
      %s239 = smul.u32 %s22, 8
      %240 = vst [vmem:[#allocation2] sm:$0xff] 0.0
      %241 = vst [vmem:[#allocation2 + $0x8] sm:$0xff] 0.0
      %242 = vst [vmem:[#allocation2 + $0x10] sm:$0xff] 0.0
      %243 = vst [vmem:[#allocation2 + $0x18] sm:$0xff] 0.0
      %244 = vst [vmem:[#allocation2 + $0x20] sm:$0xff] 0.0
      %245 = vst [vmem:[#allocation2 + $0x28] sm:$0xff] 0.0
      %246 = vst [vmem:[#allocation2 + $0x30] sm:$0xff] 0.0
      %247 = vst [vmem:[#allocation2 + $0x38] sm:$0xff] 0.0
      %248 = vst [vmem:[#allocation2 + $0x40] sm:$0xff] 0.0
      %249 = vst [vmem:[#allocation2 + $0x48] sm:$0xff] 0.0
      %250 = vst [vmem:[#allocation2 + $0x50] sm:$0xff] 0.0
      %251 = vst [vmem:[#allocation2 + $0x58] sm:$0xff] 0.0
      %252 = vst [vmem:[#allocation2 + $0x60] sm:$0xff] 0.0
      %253 = vst [vmem:[#allocation2 + $0x68] sm:$0xff] 0.0
      %254 = vst [vmem:[#allocation2 + $0x70] sm:$0xff] 0.0
      %255 = vst [vmem:[#allocation2 + $0x78] sm:$0xff] 0.0
      %s256 = smul.u32 %s239, 24
      %s257 = scalar_lea.vmem %s216, %s256
      %v258 = vld [vmem:[%s257] sm:$0xff]
      %v259 = vld [vmem:[%s257 + $0x8] sm:$0xff]
      %v260 = vld [vmem:[%s257 + $0x18] sm:$0xff]
      %v261 = vld [vmem:[%s257 + $0x20] sm:$0xff]
      %v262 = vld [vmem:[%s257 + $0x30] sm:$0xff]
      %v263 = vld [vmem:[%s257 + $0x38] sm:$0xff]
      %v264 = vld [vmem:[%s257 + $0x48] sm:$0xff]
      %v265 = vld [vmem:[%s257 + $0x50] sm:$0xff]
      %v266 = vld [vmem:[%s257 + $0x60] sm:$0xff]
      %v267 = vld [vmem:[%s257 + $0x68] sm:$0xff]
      %v268 = vld [vmem:[%s257 + $0x78] sm:$0xff]
      %v269 = vld [vmem:[%s257 + $0x80] sm:$0xff]
      %v270 = vld [vmem:[%s257 + $0x90] sm:$0xff]
      %v271 = vld [vmem:[%s257 + $0x98] sm:$0xff]
      %v272 = vld [vmem:[%s257 + $0xa8] sm:$0xff]
      %v273 = vld [vmem:[%s257 + $0xb0] sm:$0xff]
      %v274 = vld [vmem:[#allocation2] sm:$0xff]
      %v275 = vld [vmem:[#allocation2 + $0x8] sm:$0xff]
      %v276 = vld [vmem:[#allocation2 + $0x10] sm:$0xff]
      %v277 = vld [vmem:[#allocation2 + $0x18] sm:$0xff]
      %v278 = vld [vmem:[#allocation2 + $0x20] sm:$0xff]
      %v279 = vld [vmem:[#allocation2 + $0x28] sm:$0xff]
      %v280 = vld [vmem:[#allocation2 + $0x30] sm:$0xff]
      %v281 = vld [vmem:[#allocation2 + $0x38] sm:$0xff]
      %v282 = vld [vmem:[#allocation2 + $0x40] sm:$0xff]
      %v283 = vld [vmem:[#allocation2 + $0x48] sm:$0xff]
      %v284 = vld [vmem:[#allocation2 + $0x50] sm:$0xff]
      %v285 = vld [vmem:[#allocation2 + $0x58] sm:$0xff]
      %v286 = vld [vmem:[#allocation2 + $0x60] sm:$0xff]
      %v287 = vld [vmem:[#allocation2 + $0x68] sm:$0xff]
      %v288 = vld [vmem:[#allocation2 + $0x70] sm:$0xff]
      %v289 = vld [vmem:[#allocation2 + $0x78] sm:$0xff]
      %v290 = vld [vmem:[%s220] sm:$0xff]
      %v291 = vld [vmem:[%s220 + $0x8] sm:$0xff]
      %v292 = vld [vmem:[%s220 + $0x10] sm:$0xff]
      %v293 = vld [vmem:[%s220 + $0x18] sm:$0xff]
      %v294 = vld [vmem:[%s220 + $0x20] sm:$0xff]
      %v295 = vld [vmem:[%s220 + $0x28] sm:$0xff]
      %v296 = vld [vmem:[%s220 + $0x30] sm:$0xff]
      %v297 = vld [vmem:[%s220 + $0x38] sm:$0xff]
      %v298 = vld [vmem:[%s220 + $0x40] sm:$0xff]
      %v299 = vld [vmem:[%s220 + $0x48] sm:$0xff]
      %v300 = vld [vmem:[%s220 + $0x50] sm:$0xff]
      %v301 = vld [vmem:[%s220 + $0x58] sm:$0xff]
      %v302 = vld [vmem:[%s220 + $0x60] sm:$0xff]
      %v303 = vld [vmem:[%s220 + $0x68] sm:$0xff]
      %v304 = vld [vmem:[%s220 + $0x70] sm:$0xff]
      %v305 = vld [vmem:[%s220 + $0x78] sm:$0xff]
      %306 = vmatpush.msra.mxu0 %v305
      %307 = vmatpush.msra.mxu0 %v304
      %308 = vmatpush.msra.mxu0 %v303
      %309 = vmatpush.msra.mxu0 %v302
      %310 = vmatpush.msra.mxu0 %v301
      %311 = vmatpush.msra.mxu0 %v300
      %312 = vmatpush.msra.mxu0 %v299
      %313 = vmatpush.msra.mxu0 %v298
      %314 = vmatpush.msra.mxu0 %v297
      %315 = vmatpush.msra.mxu0 %v296
      %316 = vmatpush.msra.mxu0 %v295
      %317 = vmatpush.msra.mxu0 %v294
      %318 = vmatpush.msra.mxu0 %v293
      %319 = vmatpush.msra.mxu0 %v292
      %320 = vmatpush.msra.mxu0 %v291
      %321 = vmatpush.msra.mxu0 %v290
      %322 = vmatmul.f32.gmra.mxu0 %v258
      %v323 = vpop.f32.mrf.mxu0
      %v324 = vadd.f32 0.0, %v323
      %325 = vmatmul.f32.gmra.mxu0 %v259
      %v326 = vpop.f32.mrf.mxu0
      %v327 = vadd.f32 0.0, %v326
      %328 = vmatmul.f32.gmra.mxu0 %v260
      %v329 = vpop.f32.mrf.mxu0
      %v330 = vadd.f32 0.0, %v329
      %331 = vmatmul.f32.gmra.mxu0 %v261
      %v332 = vpop.f32.mrf.mxu0
      %v333 = vadd.f32 0.0, %v332
      %334 = vmatmul.f32.gmra.mxu0 %v262
      %v335 = vpop.f32.mrf.mxu0
      %v336 = vadd.f32 0.0, %v335
      %337 = vmatmul.f32.gmra.mxu0 %v263
      %v338 = vpop.f32.mrf.mxu0
      %v339 = vadd.f32 0.0, %v338
      %340 = vmatmul.f32.gmra.mxu0 %v264
      %v341 = vpop.f32.mrf.mxu0
      %v342 = vadd.f32 0.0, %v341
      %343 = vmatmul.f32.gmra.mxu0 %v265
      %v344 = vpop.f32.mrf.mxu0
      %v345 = vadd.f32 0.0, %v344
      %346 = vmatmul.f32.gmra.mxu0 %v266
      %v347 = vpop.f32.mrf.mxu0
      %v348 = vadd.f32 0.0, %v347
      %349 = vmatmul.f32.gmra.mxu0 %v267
      %v350 = vpop.f32.mrf.mxu0
      %v351 = vadd.f32 0.0, %v350
      %352 = vmatmul.f32.gmra.mxu0 %v268
      %v353 = vpop.f32.mrf.mxu0
      %v354 = vadd.f32 0.0, %v353
      %355 = vmatmul.f32.gmra.mxu0 %v269
      %v356 = vpop.f32.mrf.mxu0
      %v357 = vadd.f32 0.0, %v356
      %358 = vmatmul.f32.gmra.mxu0 %v270
      %v359 = vpop.f32.mrf.mxu0
      %v360 = vadd.f32 0.0, %v359
      %361 = vmatmul.f32.gmra.mxu0 %v271
      %v362 = vpop.f32.mrf.mxu0
      %v363 = vadd.f32 0.0, %v362
      %364 = vmatmul.f32.gmra.mxu0 %v272
      %v365 = vpop.f32.mrf.mxu0
      %v366 = vadd.f32 0.0, %v365
      %367 = vmatmul.f32.gmra.mxu0 %v273
      %v368 = vpop.f32.mrf.mxu0
      %v369 = vadd.f32 0.0, %v368
      %370 = vdwg.mxu0
      %v371 = vadd.f32 %v274, %v324
      %v372 = vadd.f32 %v275, %v327
      %v373 = vadd.f32 %v276, %v330
      %v374 = vadd.f32 %v277, %v333
      %v375 = vadd.f32 %v278, %v336
      %v376 = vadd.f32 %v279, %v339
      %v377 = vadd.f32 %v280, %v342
      %v378 = vadd.f32 %v281, %v345
      %v379 = vadd.f32 %v282, %v348
      %v380 = vadd.f32 %v283, %v351
      %v381 = vadd.f32 %v284, %v354
      %v382 = vadd.f32 %v285, %v357
      %v383 = vadd.f32 %v286, %v360
      %v384 = vadd.f32 %v287, %v363
      %v385 = vadd.f32 %v288, %v366
      %v386 = vadd.f32 %v289, %v369
      %387 = vst [vmem:[#allocation2] sm:$0xff] %v371
      %388 = vst [vmem:[#allocation2 + $0x8] sm:$0xff] %v372
      %389 = vst [vmem:[#allocation2 + $0x10] sm:$0xff] %v373
      %390 = vst [vmem:[#allocation2 + $0x18] sm:$0xff] %v374
      %391 = vst [vmem:[#allocation2 + $0x20] sm:$0xff] %v375
      %392 = vst [vmem:[#allocation2 + $0x28] sm:$0xff] %v376
      %393 = vst [vmem:[#allocation2 + $0x30] sm:$0xff] %v377
      %394 = vst [vmem:[#allocation2 + $0x38] sm:$0xff] %v378
      %395 = vst [vmem:[#allocation2 + $0x40] sm:$0xff] %v379
      %396 = vst [vmem:[#allocation2 + $0x48] sm:$0xff] %v380
      %397 = vst [vmem:[#allocation2 + $0x50] sm:$0xff] %v381
      %398 = vst [vmem:[#allocation2 + $0x58] sm:$0xff] %v382
      %399 = vst [vmem:[#allocation2 + $0x60] sm:$0xff] %v383
      %400 = vst [vmem:[#allocation2 + $0x68] sm:$0xff] %v384
      %401 = vst [vmem:[#allocation2 + $0x70] sm:$0xff] %v385
      %402 = vst [vmem:[#allocation2 + $0x78] sm:$0xff] %v386
      %v403 = vld [vmem:[%s257 + $0x1] sm:$0xff]
      %v404 = vld [vmem:[%s257 + $0x9] sm:$0xff]
      %v405 = vld [vmem:[%s257 + $0x19] sm:$0xff]
      %v406 = vld [vmem:[%s257 + $0x21] sm:$0xff]
      %v407 = vld [vmem:[%s257 + $0x31] sm:$0xff]
      %v408 = vld [vmem:[%s257 + $0x39] sm:$0xff]
      %v409 = vld [vmem:[%s257 + $0x49] sm:$0xff]
      %v410 = vld [vmem:[%s257 + $0x51] sm:$0xff]
      %v411 = vld [vmem:[%s257 + $0x61] sm:$0xff]
      %v412 = vld [vmem:[%s257 + $0x69] sm:$0xff]
      %v413 = vld [vmem:[%s257 + $0x79] sm:$0xff]
      %v414 = vld [vmem:[%s257 + $0x81] sm:$0xff]
      %v415 = vld [vmem:[%s257 + $0x91] sm:$0xff]
      %v416 = vld [vmem:[%s257 + $0x99] sm:$0xff]
      %v417 = vld [vmem:[%s257 + $0xa9] sm:$0xff]
      %v418 = vld [vmem:[%s257 + $0xb1] sm:$0xff]
      %v419 = vld [vmem:[#allocation2] sm:$0xff]
      %v420 = vld [vmem:[#allocation2 + $0x8] sm:$0xff]
      %v421 = vld [vmem:[#allocation2 + $0x10] sm:$0xff]
      %v422 = vld [vmem:[#allocation2 + $0x18] sm:$0xff]
      %v423 = vld [vmem:[#allocation2 + $0x20] sm:$0xff]
      %v424 = vld [vmem:[#allocation2 + $0x28] sm:$0xff]
      %v425 = vld [vmem:[#allocation2 + $0x30] sm:$0xff]
      %v426 = vld [vmem:[#allocation2 + $0x38] sm:$0xff]
      %v427 = vld [vmem:[#allocation2 + $0x40] sm:$0xff]
      %v428 = vld [vmem:[#allocation2 + $0x48] sm:$0xff]
      %v429 = vld [vmem:[#allocation2 + $0x50] sm:$0xff]
      %v430 = vld [vmem:[#allocation2 + $0x58] sm:$0xff]
      %v431 = vld [vmem:[#allocation2 + $0x60] sm:$0xff]
      %v432 = vld [vmem:[#allocation2 + $0x68] sm:$0xff]
      %v433 = vld [vmem:[#allocation2 + $0x70] sm:$0xff]
      %v434 = vld [vmem:[#allocation2 + $0x78] sm:$0xff]
      %s435 = scalar_lea.vmem %s220, 128
      %v436 = vld [vmem:[%s435] sm:$0xff]
      %v437 = vld [vmem:[%s435 + $0x8] sm:$0xff]
      %v438 = vld [vmem:[%s435 + $0x10] sm:$0xff]
      %v439 = vld [vmem:[%s435 + $0x18] sm:$0xff]
      %v440 = vld [vmem:[%s435 + $0x20] sm:$0xff]
      %v441 = vld [vmem:[%s435 + $0x28] sm:$0xff]
      %v442 = vld [vmem:[%s435 + $0x30] sm:$0xff]
      %v443 = vld [vmem:[%s435 + $0x38] sm:$0xff]
      %v444 = vld [vmem:[%s435 + $0x40] sm:$0xff]
      %v445 = vld [vmem:[%s435 + $0x48] sm:$0xff]
      %v446 = vld [vmem:[%s435 + $0x50] sm:$0xff]
      %v447 = vld [vmem:[%s435 + $0x58] sm:$0xff]
      %v448 = vld [vmem:[%s435 + $0x60] sm:$0xff]
      %v449 = vld [vmem:[%s435 + $0x68] sm:$0xff]
      %v450 = vld [vmem:[%s435 + $0x70] sm:$0xff]
      %v451 = vld [vmem:[%s435 + $0x78] sm:$0xff]
      %452 = vmatpush.msra.mxu0 %v451
      %453 = vmatpush.msra.mxu0 %v450
      %454 = vmatpush.msra.mxu0 %v449
      %455 = vmatpush.msra.mxu0 %v448
      %456 = vmatpush.msra.mxu0 %v447
      %457 = vmatpush.msra.mxu0 %v446
      %458 = vmatpush.msra.mxu0 %v445
      %459 = vmatpush.msra.mxu0 %v444
      %460 = vmatpush.msra.mxu0 %v443
      %461 = vmatpush.msra.mxu0 %v442
      %462 = vmatpush.msra.mxu0 %v441
      %463 = vmatpush.msra.mxu0 %v440
      %464 = vmatpush.msra.mxu0 %v439
      %465 = vmatpush.msra.mxu0 %v438
      %466 = vmatpush.msra.mxu0 %v437
      %467 = vmatpush.msra.mxu0 %v436
      %468 = vmatmul.f32.gmra.mxu0 %v403
      %v469 = vpop.f32.mrf.mxu0
      %v470 = vadd.f32 0.0, %v469
      %471 = vmatmul.f32.gmra.mxu0 %v404
      %v472 = vpop.f32.mrf.mxu0
      %v473 = vadd.f32 0.0, %v472
      %474 = vmatmul.f32.gmra.mxu0 %v405
      %v475 = vpop.f32.mrf.mxu0
      %v476 = vadd.f32 0.0, %v475
      %477 = vmatmul.f32.gmra.mxu0 %v406
      %v478 = vpop.f32.mrf.mxu0
      %v479 = vadd.f32 0.0, %v478
      %480 = vmatmul.f32.gmra.mxu0 %v407
      %v481 = vpop.f32.mrf.mxu0
      %v482 = vadd.f32 0.0, %v481
      %483 = vmatmul.f32.gmra.mxu0 %v408
      %v484 = vpop.f32.mrf.mxu0
      %v485 = vadd.f32 0.0, %v484
      %486 = vmatmul.f32.gmra.mxu0 %v409
      %v487 = vpop.f32.mrf.mxu0
      %v488 = vadd.f32 0.0, %v487
      %489 = vmatmul.f32.gmra.mxu0 %v410
      %v490 = vpop.f32.mrf.mxu0
      %v491 = vadd.f32 0.0, %v490
      %492 = vmatmul.f32.gmra.mxu0 %v411
      %v493 = vpop.f32.mrf.mxu0
      %v494 = vadd.f32 0.0, %v493
      %495 = vmatmul.f32.gmra.mxu0 %v412
      %v496 = vpop.f32.mrf.mxu0
      %v497 = vadd.f32 0.0, %v496
      %498 = vmatmul.f32.gmra.mxu0 %v413
      %v499 = vpop.f32.mrf.mxu0
      %v500 = vadd.f32 0.0, %v499
      %501 = vmatmul.f32.gmra.mxu0 %v414
      %v502 = vpop.f32.mrf.mxu0
      %v503 = vadd.f32 0.0, %v502
      %504 = vmatmul.f32.gmra.mxu0 %v415
      %v505 = vpop.f32.mrf.mxu0
      %v506 = vadd.f32 0.0, %v505
      %507 = vmatmul.f32.gmra.mxu0 %v416
      %v508 = vpop.f32.mrf.mxu0
      %v509 = vadd.f32 0.0, %v508
      %510 = vmatmul.f32.gmra.mxu0 %v417
      %v511 = vpop.f32.mrf.mxu0
      %v512 = vadd.f32 0.0, %v511
      %513 = vmatmul.f32.gmra.mxu0 %v418
      %v514 = vpop.f32.mrf.mxu0
      %v515 = vadd.f32 0.0, %v514
      %516 = vdwg.mxu0
      %v517 = vadd.f32 %v419, %v470
      %v518 = vadd.f32 %v420, %v473
      %v519 = vadd.f32 %v421, %v476
      %v520 = vadd.f32 %v422, %v479
      %v521 = vadd.f32 %v423, %v482
      %v522 = vadd.f32 %v424, %v485
      %v523 = vadd.f32 %v425, %v488
      %v524 = vadd.f32 %v426, %v491
      %v525 = vadd.f32 %v427, %v494
      %v526 = vadd.f32 %v428, %v497
      %v527 = vadd.f32 %v429, %v500
      %v528 = vadd.f32 %v430, %v503
      %v529 = vadd.f32 %v431, %v506
      %v530 = vadd.f32 %v432, %v509
      %v531 = vadd.f32 %v433, %v512
      %v532 = vadd.f32 %v434, %v515
      %533 = vst [vmem:[#allocation2] sm:$0xff] %v517
      %534 = vst [vmem:[#allocation2 + $0x8] sm:$0xff] %v518
      %535 = vst [vmem:[#allocation2 + $0x10] sm:$0xff] %v519
      %536 = vst [vmem:[#allocation2 + $0x18] sm:$0xff] %v520
      %537 = vst [vmem:[#allocation2 + $0x20] sm:$0xff] %v521
      %538 = vst [vmem:[#allocation2 + $0x28] sm:$0xff] %v522
      %539 = vst [vmem:[#allocation2 + $0x30] sm:$0xff] %v523
      %540 = vst [vmem:[#allocation2 + $0x38] sm:$0xff] %v524
      %541 = vst [vmem:[#allocation2 + $0x40] sm:$0xff] %v525
      %542 = vst [vmem:[#allocation2 + $0x48] sm:$0xff] %v526
      %543 = vst [vmem:[#allocation2 + $0x50] sm:$0xff] %v527
      %544 = vst [vmem:[#allocation2 + $0x58] sm:$0xff] %v528
      %545 = vst [vmem:[#allocation2 + $0x60] sm:$0xff] %v529
      %546 = vst [vmem:[#allocation2 + $0x68] sm:$0xff] %v530
      %547 = vst [vmem:[#allocation2 + $0x70] sm:$0xff] %v531
      %548 = vst [vmem:[#allocation2 + $0x78] sm:$0xff] %v532
      %v549 = vld [vmem:[%s257 + $0x2] sm:$0xff]
      %v550 = vld [vmem:[%s257 + $0xa] sm:$0xff]
      %v551 = vld [vmem:[%s257 + $0x1a] sm:$0xff]
      %v552 = vld [vmem:[%s257 + $0x22] sm:$0xff]
      %v553 = vld [vmem:[%s257 + $0x32] sm:$0xff]
      %v554 = vld [vmem:[%s257 + $0x3a] sm:$0xff]
      %v555 = vld [vmem:[%s257 + $0x4a] sm:$0xff]
      %v556 = vld [vmem:[%s257 + $0x52] sm:$0xff]
      %v557 = vld [vmem:[%s257 + $0x62] sm:$0xff]
      %v558 = vld [vmem:[%s257 + $0x6a] sm:$0xff]
      %v559 = vld [vmem:[%s257 + $0x7a] sm:$0xff]
      %v560 = vld [vmem:[%s257 + $0x82] sm:$0xff]
      %v561 = vld [vmem:[%s257 + $0x92] sm:$0xff]
      %v562 = vld [vmem:[%s257 + $0x9a] sm:$0xff]
      %v563 = vld [vmem:[%s257 + $0xaa] sm:$0xff]
      %v564 = vld [vmem:[%s257 + $0xb2] sm:$0xff]
      %v565 = vld [vmem:[#allocation2] sm:$0xff]
      %v566 = vld [vmem:[#allocation2 + $0x8] sm:$0xff]
      %v567 = vld [vmem:[#allocation2 + $0x10] sm:$0xff]
      %v568 = vld [vmem:[#allocation2 + $0x18] sm:$0xff]
      %v569 = vld [vmem:[#allocation2 + $0x20] sm:$0xff]
      %v570 = vld [vmem:[#allocation2 + $0x28] sm:$0xff]
      %v571 = vld [vmem:[#allocation2 + $0x30] sm:$0xff]
      %v572 = vld [vmem:[#allocation2 + $0x38] sm:$0xff]
      %v573 = vld [vmem:[#allocation2 + $0x40] sm:$0xff]
      %v574 = vld [vmem:[#allocation2 + $0x48] sm:$0xff]
      %v575 = vld [vmem:[#allocation2 + $0x50] sm:$0xff]
      %v576 = vld [vmem:[#allocation2 + $0x58] sm:$0xff]
      %v577 = vld [vmem:[#allocation2 + $0x60] sm:$0xff]
      %v578 = vld [vmem:[#allocation2 + $0x68] sm:$0xff]
      %v579 = vld [vmem:[#allocation2 + $0x70] sm:$0xff]
      %v580 = vld [vmem:[#allocation2 + $0x78] sm:$0xff]
      %s581 = scalar_lea.vmem %s220, 256
      %v582 = vld [vmem:[%s581] sm:$0xff]
      %v583 = vld [vmem:[%s581 + $0x8] sm:$0xff]
      %v584 = vld [vmem:[%s581 + $0x10] sm:$0xff]
      %v585 = vld [vmem:[%s581 + $0x18] sm:$0xff]
      %v586 = vld [vmem:[%s581 + $0x20] sm:$0xff]
      %v587 = vld [vmem:[%s581 + $0x28] sm:$0xff]
      %v588 = vld [vmem:[%s581 + $0x30] sm:$0xff]
      %v589 = vld [vmem:[%s581 + $0x38] sm:$0xff]
      %v590 = vld [vmem:[%s581 + $0x40] sm:$0xff]
      %v591 = vld [vmem:[%s581 + $0x48] sm:$0xff]
      %v592 = vld [vmem:[%s581 + $0x50] sm:$0xff]
      %v593 = vld [vmem:[%s581 + $0x58] sm:$0xff]
      %v594 = vld [vmem:[%s581 + $0x60] sm:$0xff]
      %v595 = vld [vmem:[%s581 + $0x68] sm:$0xff]
      %v596 = vld [vmem:[%s581 + $0x70] sm:$0xff]
      %v597 = vld [vmem:[%s581 + $0x78] sm:$0xff]
      %598 = vmatpush.msra.mxu0 %v597
      %599 = vmatpush.msra.mxu0 %v596
      %600 = vmatpush.msra.mxu0 %v595
      %601 = vmatpush.msra.mxu0 %v594
      %602 = vmatpush.msra.mxu0 %v593
      %603 = vmatpush.msra.mxu0 %v592
      %604 = vmatpush.msra.mxu0 %v591
      %605 = vmatpush.msra.mxu0 %v590
      %606 = vmatpush.msra.mxu0 %v589
      %607 = vmatpush.msra.mxu0 %v588
      %608 = vmatpush.msra.mxu0 %v587
      %609 = vmatpush.msra.mxu0 %v586
      %610 = vmatpush.msra.mxu0 %v585
      %611 = vmatpush.msra.mxu0 %v584
      %612 = vmatpush.msra.mxu0 %v583
      %613 = vmatpush.msra.mxu0 %v582
      %614 = vmatmul.f32.gmra.mxu0 %v549
      %v615 = vpop.f32.mrf.mxu0
      %v616 = vadd.f32 0.0, %v615
      %617 = vmatmul.f32.gmra.mxu0 %v550
      %v618 = vpop.f32.mrf.mxu0
      %v619 = vadd.f32 0.0, %v618
      %620 = vmatmul.f32.gmra.mxu0 %v551
      %v621 = vpop.f32.mrf.mxu0
      %v622 = vadd.f32 0.0, %v621
      %623 = vmatmul.f32.gmra.mxu0 %v552
      %v624 = vpop.f32.mrf.mxu0
      %v625 = vadd.f32 0.0, %v624
      %626 = vmatmul.f32.gmra.mxu0 %v553
      %v627 = vpop.f32.mrf.mxu0
      %v628 = vadd.f32 0.0, %v627
      %629 = vmatmul.f32.gmra.mxu0 %v554
      %v630 = vpop.f32.mrf.mxu0
      %v631 = vadd.f32 0.0, %v630
      %632 = vmatmul.f32.gmra.mxu0 %v555
      %v633 = vpop.f32.mrf.mxu0
      %v634 = vadd.f32 0.0, %v633
      %635 = vmatmul.f32.gmra.mxu0 %v556
      %v636 = vpop.f32.mrf.mxu0
      %v637 = vadd.f32 0.0, %v636
      %638 = vmatmul.f32.gmra.mxu0 %v557
      %v639 = vpop.f32.mrf.mxu0
      %v640 = vadd.f32 0.0, %v639
      %641 = vmatmul.f32.gmra.mxu0 %v558
      %v642 = vpop.f32.mrf.mxu0
      %v643 = vadd.f32 0.0, %v642
      %644 = vmatmul.f32.gmra.mxu0 %v559
      %v645 = vpop.f32.mrf.mxu0
      %v646 = vadd.f32 0.0, %v645
      %647 = vmatmul.f32.gmra.mxu0 %v560
      %v648 = vpop.f32.mrf.mxu0
      %v649 = vadd.f32 0.0, %v648
      %650 = vmatmul.f32.gmra.mxu0 %v561
      %v651 = vpop.f32.mrf.mxu0
      %v652 = vadd.f32 0.0, %v651
      %653 = vmatmul.f32.gmra.mxu0 %v562
      %v654 = vpop.f32.mrf.mxu0
      %v655 = vadd.f32 0.0, %v654
      %656 = vmatmul.f32.gmra.mxu0 %v563
      %v657 = vpop.f32.mrf.mxu0
      %v658 = vadd.f32 0.0, %v657
      %659 = vmatmul.f32.gmra.mxu0 %v564
      %v660 = vpop.f32.mrf.mxu0
      %v661 = vadd.f32 0.0, %v660
      %662 = vdwg.mxu0
      %v663 = vadd.f32 %v565, %v616
      %v664 = vadd.f32 %v566, %v619
      %v665 = vadd.f32 %v567, %v622
      %v666 = vadd.f32 %v568, %v625
      %v667 = vadd.f32 %v569, %v628
      %v668 = vadd.f32 %v570, %v631
      %v669 = vadd.f32 %v571, %v634
      %v670 = vadd.f32 %v572, %v637
      %v671 = vadd.f32 %v573, %v640
      %v672 = vadd.f32 %v574, %v643
      %v673 = vadd.f32 %v575, %v646
      %v674 = vadd.f32 %v576, %v649
      %v675 = vadd.f32 %v577, %v652
      %v676 = vadd.f32 %v578, %v655
      %v677 = vadd.f32 %v579, %v658
      %v678 = vadd.f32 %v580, %v661
      %679 = vst [vmem:[#allocation2] sm:$0xff] %v663
      %680 = vst [vmem:[#allocation2 + $0x8] sm:$0xff] %v664
      %681 = vst [vmem:[#allocation2 + $0x10] sm:$0xff] %v665
      %682 = vst [vmem:[#allocation2 + $0x18] sm:$0xff] %v666
      %683 = vst [vmem:[#allocation2 + $0x20] sm:$0xff] %v667
      %684 = vst [vmem:[#allocation2 + $0x28] sm:$0xff] %v668
      %685 = vst [vmem:[#allocation2 + $0x30] sm:$0xff] %v669
      %686 = vst [vmem:[#allocation2 + $0x38] sm:$0xff] %v670
      %687 = vst [vmem:[#allocation2 + $0x40] sm:$0xff] %v671
      %688 = vst [vmem:[#allocation2 + $0x48] sm:$0xff] %v672
      %689 = vst [vmem:[#allocation2 + $0x50] sm:$0xff] %v673
      %690 = vst [vmem:[#allocation2 + $0x58] sm:$0xff] %v674
      %691 = vst [vmem:[#allocation2 + $0x60] sm:$0xff] %v675
      %692 = vst [vmem:[#allocation2 + $0x68] sm:$0xff] %v676
      %693 = vst [vmem:[#allocation2 + $0x70] sm:$0xff] %v677
      %694 = vst [vmem:[#allocation2 + $0x78] sm:$0xff] %v678
      %s695 = sadd.s32 %s239, 1
      %s696 = smul.u32 %s695, 24
      %s697 = scalar_lea.vmem %s216, %s696
      %v698 = vld [vmem:[%s697] sm:$0xff]
      %v699 = vld [vmem:[%s697 + $0x8] sm:$0xff]
      %v700 = vld [vmem:[%s697 + $0x18] sm:$0xff]
      %v701 = vld [vmem:[%s697 + $0x20] sm:$0xff]
      %v702 = vld [vmem:[%s697 + $0x30] sm:$0xff]
      %v703 = vld [vmem:[%s697 + $0x38] sm:$0xff]
      %v704 = vld [vmem:[%s697 + $0x48] sm:$0xff]
      %v705 = vld [vmem:[%s697 + $0x50] sm:$0xff]
      %v706 = vld [vmem:[%s697 + $0x60] sm:$0xff]
      %v707 = vld [vmem:[%s697 + $0x68] sm:$0xff]
      %v708 = vld [vmem:[%s697 + $0x78] sm:$0xff]
      %v709 = vld [vmem:[%s697 + $0x80] sm:$0xff]
      %v710 = vld [vmem:[%s697 + $0x90] sm:$0xff]
      %v711 = vld [vmem:[%s697 + $0x98] sm:$0xff]
      %v712 = vld [vmem:[%s697 + $0xa8] sm:$0xff]
      %v713 = vld [vmem:[%s697 + $0xb0] sm:$0xff]
      %v714 = vld [vmem:[#allocation2] sm:$0xff]
      %v715 = vld [vmem:[#allocation2 + $0x8] sm:$0xff]
      %v716 = vld [vmem:[#allocation2 + $0x10] sm:$0xff]
      %v717 = vld [vmem:[#allocation2 + $0x18] sm:$0xff]
      %v718 = vld [vmem:[#allocation2 + $0x20] sm:$0xff]
      %v719 = vld [vmem:[#allocation2 + $0x28] sm:$0xff]
      %v720 = vld [vmem:[#allocation2 + $0x30] sm:$0xff]
      %v721 = vld [vmem:[#allocation2 + $0x38] sm:$0xff]
      %v722 = vld [vmem:[#allocation2 + $0x40] sm:$0xff]
      %v723 = vld [vmem:[#allocation2 + $0x48] sm:$0xff]
      %v724 = vld [vmem:[#allocation2 + $0x50] sm:$0xff]
      %v725 = vld [vmem:[#allocation2 + $0x58] sm:$0xff]
      %v726 = vld [vmem:[#allocation2 + $0x60] sm:$0xff]
      %v727 = vld [vmem:[#allocation2 + $0x68] sm:$0xff]
      %v728 = vld [vmem:[#allocation2 + $0x70] sm:$0xff]
      %v729 = vld [vmem:[#allocation2 + $0x78] sm:$0xff]
      %s730 = scalar_lea.vmem %s220, 384
      %v731 = vld [vmem:[%s730] sm:$0xff]
      %v732 = vld [vmem:[%s730 + $0x8] sm:$0xff]
      %v733 = vld [vmem:[%s730 + $0x10] sm:$0xff]
      %v734 = vld [vmem:[%s730 + $0x18] sm:$0xff]
      %v735 = vld [vmem:[%s730 + $0x20] sm:$0xff]
      %v736 = vld [vmem:[%s730 + $0x28] sm:$0xff]
      %v737 = vld [vmem:[%s730 + $0x30] sm:$0xff]
      %v738 = vld [vmem:[%s730 + $0x38] sm:$0xff]
      %v739 = vld [vmem:[%s730 + $0x40] sm:$0xff]
      %v740 = vld [vmem:[%s730 + $0x48] sm:$0xff]
      %v741 = vld [vmem:[%s730 + $0x50] sm:$0xff]
      %v742 = vld [vmem:[%s730 + $0x58] sm:$0xff]
      %v743 = vld [vmem:[%s730 + $0x60] sm:$0xff]
      %v744 = vld [vmem:[%s730 + $0x68] sm:$0xff]
      %v745 = vld [vmem:[%s730 + $0x70] sm:$0xff]
      %v746 = vld [vmem:[%s730 + $0x78] sm:$0xff]
      %747 = vmatpush.msra.mxu0 %v746
      %748 = vmatpush.msra.mxu0 %v745
      %749 = vmatpush.msra.mxu0 %v744
      %750 = vmatpush.msra.mxu0 %v743
      %751 = vmatpush.msra.mxu0 %v742
      %752 = vmatpush.msra.mxu0 %v741
      %753 = vmatpush.msra.mxu0 %v740
      %754 = vmatpush.msra.mxu0 %v739
      %755 = vmatpush.msra.mxu0 %v738
      %756 = vmatpush.msra.mxu0 %v737
      %757 = vmatpush.msra.mxu0 %v736
      %758 = vmatpush.msra.mxu0 %v735
      %759 = vmatpush.msra.mxu0 %v734
      %760 = vmatpush.msra.mxu0 %v733
      %761 = vmatpush.msra.mxu0 %v732
      %762 = vmatpush.msra.mxu0 %v731
      %763 = vmatmul.f32.gmra.mxu0 %v698
      %v764 = vpop.f32.mrf.mxu0
      %v765 = vadd.f32 0.0, %v764
      %766 = vmatmul.f32.gmra.mxu0 %v699
      %v767 = vpop.f32.mrf.mxu0
      %v768 = vadd.f32 0.0, %v767
      %769 = vmatmul.f32.gmra.mxu0 %v700
      %v770 = vpop.f32.mrf.mxu0
      %v771 = vadd.f32 0.0, %v770
      %772 = vmatmul.f32.gmra.mxu0 %v701
      %v773 = vpop.f32.mrf.mxu0
      %v774 = vadd.f32 0.0, %v773
      %775 = vmatmul.f32.gmra.mxu0 %v702
      %v776 = vpop.f32.mrf.mxu0
      %v777 = vadd.f32 0.0, %v776
      %778 = vmatmul.f32.gmra.mxu0 %v703
      %v779 = vpop.f32.mrf.mxu0
      %v780 = vadd.f32 0.0, %v779
      %781 = vmatmul.f32.gmra.mxu0 %v704
      %v782 = vpop.f32.mrf.mxu0
      %v783 = vadd.f32 0.0, %v782
      %784 = vmatmul.f32.gmra.mxu0 %v705
      %v785 = vpop.f32.mrf.mxu0
      %v786 = vadd.f32 0.0, %v785
      %787 = vmatmul.f32.gmra.mxu0 %v706
      %v788 = vpop.f32.mrf.mxu0
      %v789 = vadd.f32 0.0, %v788
      %790 = vmatmul.f32.gmra.mxu0 %v707
      %v791 = vpop.f32.mrf.mxu0
      %v792 = vadd.f32 0.0, %v791
      %793 = vmatmul.f32.gmra.mxu0 %v708
      %v794 = vpop.f32.mrf.mxu0
      %v795 = vadd.f32 0.0, %v794
      %796 = vmatmul.f32.gmra.mxu0 %v709
      %v797 = vpop.f32.mrf.mxu0
      %v798 = vadd.f32 0.0, %v797
      %799 = vmatmul.f32.gmra.mxu0 %v710
      %v800 = vpop.f32.mrf.mxu0
      %v801 = vadd.f32 0.0, %v800
      %802 = vmatmul.f32.gmra.mxu0 %v711
      %v803 = vpop.f32.mrf.mxu0
      %v804 = vadd.f32 0.0, %v803
      %805 = vmatmul.f32.gmra.mxu0 %v712
      %v806 = vpop.f32.mrf.mxu0
      %v807 = vadd.f32 0.0, %v806
      %808 = vmatmul.f32.gmra.mxu0 %v713
      %v809 = vpop.f32.mrf.mxu0
      %v810 = vadd.f32 0.0, %v809
      %811 = vdwg.mxu0
      %v812 = vadd.f32 %v714, %v765
      %v813 = vadd.f32 %v715, %v768
      %v814 = vadd.f32 %v716, %v771
      %v815 = vadd.f32 %v717, %v774
      %v816 = vadd.f32 %v718, %v777
      %v817 = vadd.f32 %v719, %v780
      %v818 = vadd.f32 %v720, %v783
      %v819 = vadd.f32 %v721, %v786
      %v820 = vadd.f32 %v722, %v789
      %v821 = vadd.f32 %v723, %v792
      %v822 = vadd.f32 %v724, %v795
      %v823 = vadd.f32 %v725, %v798
      %v824 = vadd.f32 %v726, %v801
      %v825 = vadd.f32 %v727, %v804
      %v826 = vadd.f32 %v728, %v807
      %v827 = vadd.f32 %v729, %v810
      %828 = vst [vmem:[#allocation2] sm:$0xff] %v812
      %829 = vst [vmem:[#allocation2 + $0x8] sm:$0xff] %v813
      %830 = vst [vmem:[#allocation2 + $0x10] sm:$0xff] %v814
      %831 = vst [vmem:[#allocation2 + $0x18] sm:$0xff] %v815
      %832 = vst [vmem:[#allocation2 + $0x20] sm:$0xff] %v816
      %833 = vst [vmem:[#allocation2 + $0x28] sm:$0xff] %v817
      %834 = vst [vmem:[#allocation2 + $0x30] sm:$0xff] %v818
      %835 = vst [vmem:[#allocation2 + $0x38] sm:$0xff] %v819
      %836 = vst [vmem:[#allocation2 + $0x40] sm:$0xff] %v820
      %837 = vst [vmem:[#allocation2 + $0x48] sm:$0xff] %v821
      %838 = vst [vmem:[#allocation2 + $0x50] sm:$0xff] %v822
      %839 = vst [vmem:[#allocation2 + $0x58] sm:$0xff] %v823
      %840 = vst [vmem:[#allocation2 + $0x60] sm:$0xff] %v824
      %841 = vst [vmem:[#allocation2 + $0x68] sm:$0xff] %v825
      %842 = vst [vmem:[#allocation2 + $0x70] sm:$0xff] %v826
      %843 = vst [vmem:[#allocation2 + $0x78] sm:$0xff] %v827
      %v844 = vld [vmem:[%s697 + $0x1] sm:$0xff]
      %v845 = vld [vmem:[%s697 + $0x9] sm:$0xff]
      %v846 = vld [vmem:[%s697 + $0x19] sm:$0xff]
      %v847 = vld [vmem:[%s697 + $0x21] sm:$0xff]
      %v848 = vld [vmem:[%s697 + $0x31] sm:$0xff]
      %v849 = vld [vmem:[%s697 + $0x39] sm:$0xff]
      %v850 = vld [vmem:[%s697 + $0x49] sm:$0xff]
      %v851 = vld [vmem:[%s697 + $0x51] sm:$0xff]
      %v852 = vld [vmem:[%s697 + $0x61] sm:$0xff]
      %v853 = vld [vmem:[%s697 + $0x69] sm:$0xff]
      %v854 = vld [vmem:[%s697 + $0x79] sm:$0xff]
      %v855 = vld [vmem:[%s697 + $0x81] sm:$0xff]
      %v856 = vld [vmem:[%s697 + $0x91] sm:$0xff]
      %v857 = vld [vmem:[%s697 + $0x99] sm:$0xff]
      %v858 = vld [vmem:[%s697 + $0xa9] sm:$0xff]
      %v859 = vld [vmem:[%s697 + $0xb1] sm:$0xff]
      %v860 = vld [vmem:[#allocation2] sm:$0xff]
      %v861 = vld [vmem:[#allocation2 + $0x8] sm:$0xff]
      %v862 = vld [vmem:[#allocation2 + $0x10] sm:$0xff]
      %v863 = vld [vmem:[#allocation2 + $0x18] sm:$0xff]
      %v864 = vld [vmem:[#allocation2 + $0x20] sm:$0xff]
      %v865 = vld [vmem:[#allocation2 + $0x28] sm:$0xff]
      %v866 = vld [vmem:[#allocation2 + $0x30] sm:$0xff]
      %v867 = vld [vmem:[#allocation2 + $0x38] sm:$0xff]
      %v868 = vld [vmem:[#allocation2 + $0x40] sm:$0xff]
      %v869 = vld [vmem:[#allocation2 + $0x48] sm:$0xff]
      %v870 = vld [vmem:[#allocation2 + $0x50] sm:$0xff]
      %v871 = vld [vmem:[#allocation2 + $0x58] sm:$0xff]
      %v872 = vld [vmem:[#allocation2 + $0x60] sm:$0xff]
      %v873 = vld [vmem:[#allocation2 + $0x68] sm:$0xff]
      %v874 = vld [vmem:[#allocation2 + $0x70] sm:$0xff]
      %v875 = vld [vmem:[#allocation2 + $0x78] sm:$0xff]
      %s876 = scalar_lea.vmem %s220, 512
      %v877 = vld [vmem:[%s876] sm:$0xff]
      %v878 = vld [vmem:[%s876 + $0x8] sm:$0xff]
      %v879 = vld [vmem:[%s876 + $0x10] sm:$0xff]
      %v880 = vld [vmem:[%s876 + $0x18] sm:$0xff]
      %v881 = vld [vmem:[%s876 + $0x20] sm:$0xff]
      %v882 = vld [vmem:[%s876 + $0x28] sm:$0xff]
      %v883 = vld [vmem:[%s876 + $0x30] sm:$0xff]
      %v884 = vld [vmem:[%s876 + $0x38] sm:$0xff]
      %v885 = vld [vmem:[%s876 + $0x40] sm:$0xff]
      %v886 = vld [vmem:[%s876 + $0x48] sm:$0xff]
      %v887 = vld [vmem:[%s876 + $0x50] sm:$0xff]
      %v888 = vld [vmem:[%s876 + $0x58] sm:$0xff]
      %v889 = vld [vmem:[%s876 + $0x60] sm:$0xff]
      %v890 = vld [vmem:[%s876 + $0x68] sm:$0xff]
      %v891 = vld [vmem:[%s876 + $0x70] sm:$0xff]
      %v892 = vld [vmem:[%s876 + $0x78] sm:$0xff]
      %893 = vmatpush.msra.mxu0 %v892
      %894 = vmatpush.msra.mxu0 %v891
      %895 = vmatpush.msra.mxu0 %v890
      %896 = vmatpush.msra.mxu0 %v889
      %897 = vmatpush.msra.mxu0 %v888
      %898 = vmatpush.msra.mxu0 %v887
      %899 = vmatpush.msra.mxu0 %v886
      %900 = vmatpush.msra.mxu0 %v885
      %901 = vmatpush.msra.mxu0 %v884
      %902 = vmatpush.msra.mxu0 %v883
      %903 = vmatpush.msra.mxu0 %v882
      %904 = vmatpush.msra.mxu0 %v881
      %905 = vmatpush.msra.mxu0 %v880
      %906 = vmatpush.msra.mxu0 %v879
      %907 = vmatpush.msra.mxu0 %v878
      %908 = vmatpush.msra.mxu0 %v877
      %909 = vmatmul.f32.gmra.mxu0 %v844
      %v910 = vpop.f32.mrf.mxu0
      %v911 = vadd.f32 0.0, %v910
      %912 = vmatmul.f32.gmra.mxu0 %v845
      %v913 = vpop.f32.mrf.mxu0
      %v914 = vadd.f32 0.0, %v913
      %915 = vmatmul.f32.gmra.mxu0 %v846
      %v916 = vpop.f32.mrf.mxu0
      %v917 = vadd.f32 0.0, %v916
      %918 = vmatmul.f32.gmra.mxu0 %v847
      %v919 = vpop.f32.mrf.mxu0
      %v920 = vadd.f32 0.0, %v919
      %921 = vmatmul.f32.gmra.mxu0 %v848
      %v922 = vpop.f32.mrf.mxu0
      %v923 = vadd.f32 0.0, %v922
      %924 = vmatmul.f32.gmra.mxu0 %v849
      %v925 = vpop.f32.mrf.mxu0
      %v926 = vadd.f32 0.0, %v925
      %927 = vmatmul.f32.gmra.mxu0 %v850
      %v928 = vpop.f32.mrf.mxu0
      %v929 = vadd.f32 0.0, %v928
      %930 = vmatmul.f32.gmra.mxu0 %v851
      %v931 = vpop.f32.mrf.mxu0
      %v932 = vadd.f32 0.0, %v931
      %933 = vmatmul.f32.gmra.mxu0 %v852
      %v934 = vpop.f32.mrf.mxu0
      %v935 = vadd.f32 0.0, %v934
      %936 = vmatmul.f32.gmra.mxu0 %v853
      %v937 = vpop.f32.mrf.mxu0
      %v938 = vadd.f32 0.0, %v937
      %939 = vmatmul.f32.gmra.mxu0 %v854
      %v940 = vpop.f32.mrf.mxu0
      %v941 = vadd.f32 0.0, %v940
      %942 = vmatmul.f32.gmra.mxu0 %v855
      %v943 = vpop.f32.mrf.mxu0
      %v944 = vadd.f32 0.0, %v943
      %945 = vmatmul.f32.gmra.mxu0 %v856
      %v946 = vpop.f32.mrf.mxu0
      %v947 = vadd.f32 0.0, %v946
      %948 = vmatmul.f32.gmra.mxu0 %v857
      %v949 = vpop.f32.mrf.mxu0
      %v950 = vadd.f32 0.0, %v949
      %951 = vmatmul.f32.gmra.mxu0 %v858
      %v952 = vpop.f32.mrf.mxu0
      %v953 = vadd.f32 0.0, %v952
      %954 = vmatmul.f32.gmra.mxu0 %v859
      %v955 = vpop.f32.mrf.mxu0
      %v956 = vadd.f32 0.0, %v955
      %957 = vdwg.mxu0
      %v958 = vadd.f32 %v860, %v911
      %v959 = vadd.f32 %v861, %v914
      %v960 = vadd.f32 %v862, %v917
      %v961 = vadd.f32 %v863, %v920
      %v962 = vadd.f32 %v864, %v923
      %v963 = vadd.f32 %v865, %v926
      %v964 = vadd.f32 %v866, %v929
      %v965 = vadd.f32 %v867, %v932
      %v966 = vadd.f32 %v868, %v935
      %v967 = vadd.f32 %v869, %v938
      %v968 = vadd.f32 %v870, %v941
      %v969 = vadd.f32 %v871, %v944
      %v970 = vadd.f32 %v872, %v947
      %v971 = vadd.f32 %v873, %v950
      %v972 = vadd.f32 %v874, %v953
      %v973 = vadd.f32 %v875, %v956
      %974 = vst [vmem:[#allocation2] sm:$0xff] %v958
      %975 = vst [vmem:[#allocation2 + $0x8] sm:$0xff] %v959
      %976 = vst [vmem:[#allocation2 + $0x10] sm:$0xff] %v960
      %977 = vst [vmem:[#allocation2 + $0x18] sm:$0xff] %v961
      %978 = vst [vmem:[#allocation2 + $0x20] sm:$0xff] %v962
      %979 = vst [vmem:[#allocation2 + $0x28] sm:$0xff] %v963
      %980 = vst [vmem:[#allocation2 + $0x30] sm:$0xff] %v964
      %981 = vst [vmem:[#allocation2 + $0x38] sm:$0xff] %v965
      %982 = vst [vmem:[#allocation2 + $0x40] sm:$0xff] %v966
      %983 = vst [vmem:[#allocation2 + $0x48] sm:$0xff] %v967
      %984 = vst [vmem:[#allocation2 + $0x50] sm:$0xff] %v968
      %985 = vst [vmem:[#allocation2 + $0x58] sm:$0xff] %v969
      %986 = vst [vmem:[#allocation2 + $0x60] sm:$0xff] %v970
      %987 = vst [vmem:[#allocation2 + $0x68] sm:$0xff] %v971
      %988 = vst [vmem:[#allocation2 + $0x70] sm:$0xff] %v972
      %989 = vst [vmem:[#allocation2 + $0x78] sm:$0xff] %v973
      %v990 = vld [vmem:[%s697 + $0x2] sm:$0xff]
      %v991 = vld [vmem:[%s697 + $0xa] sm:$0xff]
      %v992 = vld [vmem:[%s697 + $0x1a] sm:$0xff]
      %v993 = vld [vmem:[%s697 + $0x22] sm:$0xff]
      %v994 = vld [vmem:[%s697 + $0x32] sm:$0xff]
      %v995 = vld [vmem:[%s697 + $0x3a] sm:$0xff]
      %v996 = vld [vmem:[%s697 + $0x4a] sm:$0xff]
      %v997 = vld [vmem:[%s697 + $0x52] sm:$0xff]
      %v998 = vld [vmem:[%s697 + $0x62] sm:$0xff]
      %v999 = vld [vmem:[%s697 + $0x6a] sm:$0xff]
      %v1000 = vld [vmem:[%s697 + $0x7a] sm:$0xff]
      %v1001 = vld [vmem:[%s697 + $0x82] sm:$0xff]
      %v1002 = vld [vmem:[%s697 + $0x92] sm:$0xff]
      %v1003 = vld [vmem:[%s697 + $0x9a] sm:$0xff]
      %v1004 = vld [vmem:[%s697 + $0xaa] sm:$0xff]
      %v1005 = vld [vmem:[%s697 + $0xb2] sm:$0xff]
      %v1006 = vld [vmem:[#allocation2] sm:$0xff]
      %v1007 = vld [vmem:[#allocation2 + $0x8] sm:$0xff]
      %v1008 = vld [vmem:[#allocation2 + $0x10] sm:$0xff]
      %v1009 = vld [vmem:[#allocation2 + $0x18] sm:$0xff]
      %v1010 = vld [vmem:[#allocation2 + $0x20] sm:$0xff]
      %v1011 = vld [vmem:[#allocation2 + $0x28] sm:$0xff]
      %v1012 = vld [vmem:[#allocation2 + $0x30] sm:$0xff]
      %v1013 = vld [vmem:[#allocation2 + $0x38] sm:$0xff]
      %v1014 = vld [vmem:[#allocation2 + $0x40] sm:$0xff]
      %v1015 = vld [vmem:[#allocation2 + $0x48] sm:$0xff]
      %v1016 = vld [vmem:[#allocation2 + $0x50] sm:$0xff]
      %v1017 = vld [vmem:[#allocation2 + $0x58] sm:$0xff]
      %v1018 = vld [vmem:[#allocation2 + $0x60] sm:$0xff]
      %v1019 = vld [vmem:[#allocation2 + $0x68] sm:$0xff]
      %v1020 = vld [vmem:[#allocation2 + $0x70] sm:$0xff]
      %v1021 = vld [vmem:[#allocation2 + $0x78] sm:$0xff]
      %s1022 = scalar_lea.vmem %s220, 640
      %v1023 = vld [vmem:[%s1022] sm:$0xff]
      %v1024 = vld [vmem:[%s1022 + $0x8] sm:$0xff]
      %v1025 = vld [vmem:[%s1022 + $0x10] sm:$0xff]
      %v1026 = vld [vmem:[%s1022 + $0x18] sm:$0xff]
      %v1027 = vld [vmem:[%s1022 + $0x20] sm:$0xff]
      %v1028 = vld [vmem:[%s1022 + $0x28] sm:$0xff]
      %v1029 = vld [vmem:[%s1022 + $0x30] sm:$0xff]
      %v1030 = vld [vmem:[%s1022 + $0x38] sm:$0xff]
      %v1031 = vld [vmem:[%s1022 + $0x40] sm:$0xff]
      %v1032 = vld [vmem:[%s1022 + $0x48] sm:$0xff]
      %v1033 = vld [vmem:[%s1022 + $0x50] sm:$0xff]
      %v1034 = vld [vmem:[%s1022 + $0x58] sm:$0xff]
      %v1035 = vld [vmem:[%s1022 + $0x60] sm:$0xff]
      %v1036 = vld [vmem:[%s1022 + $0x68] sm:$0xff]
      %v1037 = vld [vmem:[%s1022 + $0x70] sm:$0xff]
      %v1038 = vld [vmem:[%s1022 + $0x78] sm:$0xff]
      %1039 = vmatpush.msra.mxu0 %v1038
      %1040 = vmatpush.msra.mxu0 %v1037
      %1041 = vmatpush.msra.mxu0 %v1036
      %1042 = vmatpush.msra.mxu0 %v1035
      %1043 = vmatpush.msra.mxu0 %v1034
      %1044 = vmatpush.msra.mxu0 %v1033
      %1045 = vmatpush.msra.mxu0 %v1032
      %1046 = vmatpush.msra.mxu0 %v1031
      %1047 = vmatpush.msra.mxu0 %v1030
      %1048 = vmatpush.msra.mxu0 %v1029
      %1049 = vmatpush.msra.mxu0 %v1028
      %1050 = vmatpush.msra.mxu0 %v1027
      %1051 = vmatpush.msra.mxu0 %v1026
      %1052 = vmatpush.msra.mxu0 %v1025
      %1053 = vmatpush.msra.mxu0 %v1024
      %1054 = vmatpush.msra.mxu0 %v1023
      %1055 = vmatmul.f32.gmra.mxu0 %v990
      %v1056 = vpop.f32.mrf.mxu0
      %v1057 = vadd.f32 0.0, %v1056
      %1058 = vmatmul.f32.gmra.mxu0 %v991
      %v1059 = vpop.f32.mrf.mxu0
      %v1060 = vadd.f32 0.0, %v1059
      %1061 = vmatmul.f32.gmra.mxu0 %v992
      %v1062 = vpop.f32.mrf.mxu0
      %v1063 = vadd.f32 0.0, %v1062
      %1064 = vmatmul.f32.gmra.mxu0 %v993
      %v1065 = vpop.f32.mrf.mxu0
      %v1066 = vadd.f32 0.0, %v1065
      %1067 = vmatmul.f32.gmra.mxu0 %v994
      %v1068 = vpop.f32.mrf.mxu0
      %v1069 = vadd.f32 0.0, %v1068
      %1070 = vmatmul.f32.gmra.mxu0 %v995
      %v1071 = vpop.f32.mrf.mxu0
      %v1072 = vadd.f32 0.0, %v1071
      %1073 = vmatmul.f32.gmra.mxu0 %v996
      %v1074 = vpop.f32.mrf.mxu0
      %v1075 = vadd.f32 0.0, %v1074
      %1076 = vmatmul.f32.gmra.mxu0 %v997
      %v1077 = vpop.f32.mrf.mxu0
      %v1078 = vadd.f32 0.0, %v1077
      %1079 = vmatmul.f32.gmra.mxu0 %v998
      %v1080 = vpop.f32.mrf.mxu0
      %v1081 = vadd.f32 0.0, %v1080
      %1082 = vmatmul.f32.gmra.mxu0 %v999
      %v1083 = vpop.f32.mrf.mxu0
      %v1084 = vadd.f32 0.0, %v1083
      %1085 = vmatmul.f32.gmra.mxu0 %v1000
      %v1086 = vpop.f32.mrf.mxu0
      %v1087 = vadd.f32 0.0, %v1086
      %1088 = vmatmul.f32.gmra.mxu0 %v1001
      %v1089 = vpop.f32.mrf.mxu0
      %v1090 = vadd.f32 0.0, %v1089
      %1091 = vmatmul.f32.gmra.mxu0 %v1002
      %v1092 = vpop.f32.mrf.mxu0
      %v1093 = vadd.f32 0.0, %v1092
      %1094 = vmatmul.f32.gmra.mxu0 %v1003
      %v1095 = vpop.f32.mrf.mxu0
      %v1096 = vadd.f32 0.0, %v1095
      %1097 = vmatmul.f32.gmra.mxu0 %v1004
      %v1098 = vpop.f32.mrf.mxu0
      %v1099 = vadd.f32 0.0, %v1098
      %1100 = vmatmul.f32.gmra.mxu0 %v1005
      %v1101 = vpop.f32.mrf.mxu0
      %v1102 = vadd.f32 0.0, %v1101
      %1103 = vdwg.mxu0
      %v1104 = vadd.f32 %v1006, %v1057
      %v1105 = vadd.f32 %v1007, %v1060
      %v1106 = vadd.f32 %v1008, %v1063
      %v1107 = vadd.f32 %v1009, %v1066
      %v1108 = vadd.f32 %v1010, %v1069
      %v1109 = vadd.f32 %v1011, %v1072
      %v1110 = vadd.f32 %v1012, %v1075
      %v1111 = vadd.f32 %v1013, %v1078
      %v1112 = vadd.f32 %v1014, %v1081
      %v1113 = vadd.f32 %v1015, %v1084
      %v1114 = vadd.f32 %v1016, %v1087
      %v1115 = vadd.f32 %v1017, %v1090
      %v1116 = vadd.f32 %v1018, %v1093
      %v1117 = vadd.f32 %v1019, %v1096
      %v1118 = vadd.f32 %v1020, %v1099
      %v1119 = vadd.f32 %v1021, %v1102
      %1120 = vst [vmem:[#allocation2] sm:$0xff] %v1104
      %1121 = vst [vmem:[#allocation2 + $0x8] sm:$0xff] %v1105
      %1122 = vst [vmem:[#allocation2 + $0x10] sm:$0xff] %v1106
      %1123 = vst [vmem:[#allocation2 + $0x18] sm:$0xff] %v1107
      %1124 = vst [vmem:[#allocation2 + $0x20] sm:$0xff] %v1108
      %1125 = vst [vmem:[#allocation2 + $0x28] sm:$0xff] %v1109
      %1126 = vst [vmem:[#allocation2 + $0x30] sm:$0xff] %v1110
      %1127 = vst [vmem:[#allocation2 + $0x38] sm:$0xff] %v1111
      %1128 = vst [vmem:[#allocation2 + $0x40] sm:$0xff] %v1112
      %1129 = vst [vmem:[#allocation2 + $0x48] sm:$0xff] %v1113
      %1130 = vst [vmem:[#allocation2 + $0x50] sm:$0xff] %v1114
      %1131 = vst [vmem:[#allocation2 + $0x58] sm:$0xff] %v1115
      %1132 = vst [vmem:[#allocation2 + $0x60] sm:$0xff] %v1116
      %1133 = vst [vmem:[#allocation2 + $0x68] sm:$0xff] %v1117
      %1134 = vst [vmem:[#allocation2 + $0x70] sm:$0xff] %v1118
      %1135 = vst [vmem:[#allocation2 + $0x78] sm:$0xff] %v1119
      %s1136 = sadd.s32 %s239, 2
      %s1137 = smul.u32 %s1136, 24
      %s1138 = scalar_lea.vmem %s216, %s1137
      %v1139 = vld [vmem:[%s1138] sm:$0xff]
      %v1140 = vld [vmem:[%s1138 + $0x8] sm:$0xff]
      %v1141 = vld [vmem:[%s1138 + $0x18] sm:$0xff]
      %v1142 = vld [vmem:[%s1138 + $0x20] sm:$0xff]
      %v1143 = vld [vmem:[%s1138 + $0x30] sm:$0xff]
      %v1144 = vld [vmem:[%s1138 + $0x38] sm:$0xff]
      %v1145 = vld [vmem:[%s1138 + $0x48] sm:$0xff]
      %v1146 = vld [vmem:[%s1138 + $0x50] sm:$0xff]
      %v1147 = vld [vmem:[%s1138 + $0x60] sm:$0xff]
      %v1148 = vld [vmem:[%s1138 + $0x68] sm:$0xff]
      %v1149 = vld [vmem:[%s1138 + $0x78] sm:$0xff]
      %v1150 = vld [vmem:[%s1138 + $0x80] sm:$0xff]
      %v1151 = vld [vmem:[%s1138 + $0x90] sm:$0xff]
      %v1152 = vld [vmem:[%s1138 + $0x98] sm:$0xff]
      %v1153 = vld [vmem:[%s1138 + $0xa8] sm:$0xff]
      %v1154 = vld [vmem:[%s1138 + $0xb0] sm:$0xff]
      %v1155 = vld [vmem:[#allocation2] sm:$0xff]
      %v1156 = vld [vmem:[#allocation2 + $0x8] sm:$0xff]
      %v1157 = vld [vmem:[#allocation2 + $0x10] sm:$0xff]
      %v1158 = vld [vmem:[#allocation2 + $0x18] sm:$0xff]
      %v1159 = vld [vmem:[#allocation2 + $0x20] sm:$0xff]
      %v1160 = vld [vmem:[#allocation2 + $0x28] sm:$0xff]
      %v1161 = vld [vmem:[#allocation2 + $0x30] sm:$0xff]
      %v1162 = vld [vmem:[#allocation2 + $0x38] sm:$0xff]
      %v1163 = vld [vmem:[#allocation2 + $0x40] sm:$0xff]
      %v1164 = vld [vmem:[#allocation2 + $0x48] sm:$0xff]
      %v1165 = vld [vmem:[#allocation2 + $0x50] sm:$0xff]
      %v1166 = vld [vmem:[#allocation2 + $0x58] sm:$0xff]
      %v1167 = vld [vmem:[#allocation2 + $0x60] sm:$0xff]
      %v1168 = vld [vmem:[#allocation2 + $0x68] sm:$0xff]
      %v1169 = vld [vmem:[#allocation2 + $0x70] sm:$0xff]
      %v1170 = vld [vmem:[#allocation2 + $0x78] sm:$0xff]
      %s1171 = scalar_lea.vmem %s220, 768
      %v1172 = vld [vmem:[%s1171] sm:$0xff]
      %v1173 = vld [vmem:[%s1171 + $0x8] sm:$0xff]
      %v1174 = vld [vmem:[%s1171 + $0x10] sm:$0xff]
      %v1175 = vld [vmem:[%s1171 + $0x18] sm:$0xff]
      %v1176 = vld [vmem:[%s1171 + $0x20] sm:$0xff]
      %v1177 = vld [vmem:[%s1171 + $0x28] sm:$0xff]
      %v1178 = vld [vmem:[%s1171 + $0x30] sm:$0xff]
      %v1179 = vld [vmem:[%s1171 + $0x38] sm:$0xff]
      %v1180 = vld [vmem:[%s1171 + $0x40] sm:$0xff]
      %v1181 = vld [vmem:[%s1171 + $0x48] sm:$0xff]
      %v1182 = vld [vmem:[%s1171 + $0x50] sm:$0xff]
      %v1183 = vld [vmem:[%s1171 + $0x58] sm:$0xff]
      %v1184 = vld [vmem:[%s1171 + $0x60] sm:$0xff]
      %v1185 = vld [vmem:[%s1171 + $0x68] sm:$0xff]
      %v1186 = vld [vmem:[%s1171 + $0x70] sm:$0xff]
      %v1187 = vld [vmem:[%s1171 + $0x78] sm:$0xff]
      %1188 = vmatpush.msra.mxu0 %v1187
      %1189 = vmatpush.msra.mxu0 %v1186
      %1190 = vmatpush.msra.mxu0 %v1185
      %1191 = vmatpush.msra.mxu0 %v1184
      %1192 = vmatpush.msra.mxu0 %v1183
      %1193 = vmatpush.msra.mxu0 %v1182
      %1194 = vmatpush.msra.mxu0 %v1181
      %1195 = vmatpush.msra.mxu0 %v1180
      %1196 = vmatpush.msra.mxu0 %v1179
      %1197 = vmatpush.msra.mxu0 %v1178
      %1198 = vmatpush.msra.mxu0 %v1177
      %1199 = vmatpush.msra.mxu0 %v1176
      %1200 = vmatpush.msra.mxu0 %v1175
      %1201 = vmatpush.msra.mxu0 %v1174
      %1202 = vmatpush.msra.mxu0 %v1173
      %1203 = vmatpush.msra.mxu0 %v1172
      %1204 = vmatmul.f32.gmra.mxu0 %v1139
      %v1205 = vpop.f32.mrf.mxu0
      %v1206 = vadd.f32 0.0, %v1205
      %1207 = vmatmul.f32.gmra.mxu0 %v1140
      %v1208 = vpop.f32.mrf.mxu0
      %v1209 = vadd.f32 0.0, %v1208
      %1210 = vmatmul.f32.gmra.mxu0 %v1141
      %v1211 = vpop.f32.mrf.mxu0
      %v1212 = vadd.f32 0.0, %v1211
      %1213 = vmatmul.f32.gmra.mxu0 %v1142
      %v1214 = vpop.f32.mrf.mxu0
      %v1215 = vadd.f32 0.0, %v1214
      %1216 = vmatmul.f32.gmra.mxu0 %v1143
      %v1217 = vpop.f32.mrf.mxu0
      %v1218 = vadd.f32 0.0, %v1217
      %1219 = vmatmul.f32.gmra.mxu0 %v1144
      %v1220 = vpop.f32.mrf.mxu0
      %v1221 = vadd.f32 0.0, %v1220
      %1222 = vmatmul.f32.gmra.mxu0 %v1145
      %v1223 = vpop.f32.mrf.mxu0
      %v1224 = vadd.f32 0.0, %v1223
      %1225 = vmatmul.f32.gmra.mxu0 %v1146
      %v1226 = vpop.f32.mrf.mxu0
      %v1227 = vadd.f32 0.0, %v1226
      %1228 = vmatmul.f32.gmra.mxu0 %v1147
      %v1229 = vpop.f32.mrf.mxu0
      %v1230 = vadd.f32 0.0, %v1229
      %1231 = vmatmul.f32.gmra.mxu0 %v1148
      %v1232 = vpop.f32.mrf.mxu0
      %v1233 = vadd.f32 0.0, %v1232
      %1234 = vmatmul.f32.gmra.mxu0 %v1149
      %v1235 = vpop.f32.mrf.mxu0
      %v1236 = vadd.f32 0.0, %v1235
      %1237 = vmatmul.f32.gmra.mxu0 %v1150
      %v1238 = vpop.f32.mrf.mxu0
      %v1239 = vadd.f32 0.0, %v1238
      %1240 = vmatmul.f32.gmra.mxu0 %v1151
      %v1241 = vpop.f32.mrf.mxu0
      %v1242 = vadd.f32 0.0, %v1241
      %1243 = vmatmul.f32.gmra.mxu0 %v1152
      %v1244 = vpop.f32.mrf.mxu0
      %v1245 = vadd.f32 0.0, %v1244
      %1246 = vmatmul.f32.gmra.mxu0 %v1153
      %v1247 = vpop.f32.mrf.mxu0
      %v1248 = vadd.f32 0.0, %v1247
      %1249 = vmatmul.f32.gmra.mxu0 %v1154
      %v1250 = vpop.f32.mrf.mxu0
      %v1251 = vadd.f32 0.0, %v1250
      %1252 = vdwg.mxu0
      %v1253 = vadd.f32 %v1155, %v1206
      %v1254 = vadd.f32 %v1156, %v1209
      %v1255 = vadd.f32 %v1157, %v1212
      %v1256 = vadd.f32 %v1158, %v1215
      %v1257 = vadd.f32 %v1159, %v1218
      %v1258 = vadd.f32 %v1160, %v1221
      %v1259 = vadd.f32 %v1161, %v1224
      %v1260 = vadd.f32 %v1162, %v1227
      %v1261 = vadd.f32 %v1163, %v1230
      %v1262 = vadd.f32 %v1164, %v1233
      %v1263 = vadd.f32 %v1165, %v1236
      %v1264 = vadd.f32 %v1166, %v1239
      %v1265 = vadd.f32 %v1167, %v1242
      %v1266 = vadd.f32 %v1168, %v1245
      %v1267 = vadd.f32 %v1169, %v1248
      %v1268 = vadd.f32 %v1170, %v1251
      %1269 = vst [vmem:[#allocation2] sm:$0xff] %v1253
      %1270 = vst [vmem:[#allocation2 + $0x8] sm:$0xff] %v1254
      %1271 = vst [vmem:[#allocation2 + $0x10] sm:$0xff] %v1255
      %1272 = vst [vmem:[#allocation2 + $0x18] sm:$0xff] %v1256
      %1273 = vst [vmem:[#allocation2 + $0x20] sm:$0xff] %v1257
      %1274 = vst [vmem:[#allocation2 + $0x28] sm:$0xff] %v1258
      %1275 = vst [vmem:[#allocation2 + $0x30] sm:$0xff] %v1259
      %1276 = vst [vmem:[#allocation2 + $0x38] sm:$0xff] %v1260
      %1277 = vst [vmem:[#allocation2 + $0x40] sm:$0xff] %v1261
      %1278 = vst [vmem:[#allocation2 + $0x48] sm:$0xff] %v1262
      %1279 = vst [vmem:[#allocation2 + $0x50] sm:$0xff] %v1263
      %1280 = vst [vmem:[#allocation2 + $0x58] sm:$0xff] %v1264
      %1281 = vst [vmem:[#allocation2 + $0x60] sm:$0xff] %v1265
      %1282 = vst [vmem:[#allocation2 + $0x68] sm:$0xff] %v1266
      %1283 = vst [vmem:[#allocation2 + $0x70] sm:$0xff] %v1267
      %1284 = vst [vmem:[#allocation2 + $0x78] sm:$0xff] %v1268
      %v1285 = vld [vmem:[%s1138 + $0x1] sm:$0xff]
      %v1286 = vld [vmem:[%s1138 + $0x9] sm:$0xff]
      %v1287 = vld [vmem:[%s1138 + $0x19] sm:$0xff]
      %v1288 = vld [vmem:[%s1138 + $0x21] sm:$0xff]
      %v1289 = vld [vmem:[%s1138 + $0x31] sm:$0xff]
      %v1290 = vld [vmem:[%s1138 + $0x39] sm:$0xff]
      %v1291 = vld [vmem:[%s1138 + $0x49] sm:$0xff]
      %v1292 = vld [vmem:[%s1138 + $0x51] sm:$0xff]
      %v1293 = vld [vmem:[%s1138 + $0x61] sm:$0xff]
      %v1294 = vld [vmem:[%s1138 + $0x69] sm:$0xff]
      %v1295 = vld [vmem:[%s1138 + $0x79] sm:$0xff]
      %v1296 = vld [vmem:[%s1138 + $0x81] sm:$0xff]
      %v1297 = vld [vmem:[%s1138 + $0x91] sm:$0xff]
      %v1298 = vld [vmem:[%s1138 + $0x99] sm:$0xff]
      %v1299 = vld [vmem:[%s1138 + $0xa9] sm:$0xff]
      %v1300 = vld [vmem:[%s1138 + $0xb1] sm:$0xff]
      %v1301 = vld [vmem:[#allocation2] sm:$0xff]
      %v1302 = vld [vmem:[#allocation2 + $0x8] sm:$0xff]
      %v1303 = vld [vmem:[#allocation2 + $0x10] sm:$0xff]
      %v1304 = vld [vmem:[#allocation2 + $0x18] sm:$0xff]
      %v1305 = vld [vmem:[#allocation2 + $0x20] sm:$0xff]
      %v1306 = vld [vmem:[#allocation2 + $0x28] sm:$0xff]
      %v1307 = vld [vmem:[#allocation2 + $0x30] sm:$0xff]
      %v1308 = vld [vmem:[#allocation2 + $0x38] sm:$0xff]
      %v1309 = vld [vmem:[#allocation2 + $0x40] sm:$0xff]
      %v1310 = vld [vmem:[#allocation2 + $0x48] sm:$0xff]
      %v1311 = vld [vmem:[#allocation2 + $0x50] sm:$0xff]
      %v1312 = vld [vmem:[#allocation2 + $0x58] sm:$0xff]
      %v1313 = vld [vmem:[#allocation2 + $0x60] sm:$0xff]
      %v1314 = vld [vmem:[#allocation2 + $0x68] sm:$0xff]
      %v1315 = vld [vmem:[#allocation2 + $0x70] sm:$0xff]
      %v1316 = vld [vmem:[#allocation2 + $0x78] sm:$0xff]
      %s1317 = scalar_lea.vmem %s220, 896
      %v1318 = vld [vmem:[%s1317] sm:$0xff]
      %v1319 = vld [vmem:[%s1317 + $0x8] sm:$0xff]
      %v1320 = vld [vmem:[%s1317 + $0x10] sm:$0xff]
      %v1321 = vld [vmem:[%s1317 + $0x18] sm:$0xff]
      %v1322 = vld [vmem:[%s1317 + $0x20] sm:$0xff]
      %v1323 = vld [vmem:[%s1317 + $0x28] sm:$0xff]
      %v1324 = vld [vmem:[%s1317 + $0x30] sm:$0xff]
      %v1325 = vld [vmem:[%s1317 + $0x38] sm:$0xff]
      %v1326 = vld [vmem:[%s1317 + $0x40] sm:$0xff]
      %v1327 = vld [vmem:[%s1317 + $0x48] sm:$0xff]
      %v1328 = vld [vmem:[%s1317 + $0x50] sm:$0xff]
      %v1329 = vld [vmem:[%s1317 + $0x58] sm:$0xff]
      %v1330 = vld [vmem:[%s1317 + $0x60] sm:$0xff]
      %v1331 = vld [vmem:[%s1317 + $0x68] sm:$0xff]
      %v1332 = vld [vmem:[%s1317 + $0x70] sm:$0xff]
      %v1333 = vld [vmem:[%s1317 + $0x78] sm:$0xff]
      %1334 = vmatpush.msra.mxu0 %v1333
      %1335 = vmatpush.msra.mxu0 %v1332
      %1336 = vmatpush.msra.mxu0 %v1331
      %1337 = vmatpush.msra.mxu0 %v1330
      %1338 = vmatpush.msra.mxu0 %v1329
      %1339 = vmatpush.msra.mxu0 %v1328
      %1340 = vmatpush.msra.mxu0 %v1327
      %1341 = vmatpush.msra.mxu0 %v1326
      %1342 = vmatpush.msra.mxu0 %v1325
      %1343 = vmatpush.msra.mxu0 %v1324
      %1344 = vmatpush.msra.mxu0 %v1323
      %1345 = vmatpush.msra.mxu0 %v1322
      %1346 = vmatpush.msra.mxu0 %v1321
      %1347 = vmatpush.msra.mxu0 %v1320
      %1348 = vmatpush.msra.mxu0 %v1319
      %1349 = vmatpush.msra.mxu0 %v1318
      %1350 = vmatmul.f32.gmra.mxu0 %v1285
      %v1351 = vpop.f32.mrf.mxu0
      %v1352 = vadd.f32 0.0, %v1351
      %1353 = vmatmul.f32.gmra.mxu0 %v1286
      %v1354 = vpop.f32.mrf.mxu0
      %v1355 = vadd.f32 0.0, %v1354
      %1356 = vmatmul.f32.gmra.mxu0 %v1287
      %v1357 = vpop.f32.mrf.mxu0
      %v1358 = vadd.f32 0.0, %v1357
      %1359 = vmatmul.f32.gmra.mxu0 %v1288
      %v1360 = vpop.f32.mrf.mxu0
      %v1361 = vadd.f32 0.0, %v1360
      %1362 = vmatmul.f32.gmra.mxu0 %v1289
      %v1363 = vpop.f32.mrf.mxu0
      %v1364 = vadd.f32 0.0, %v1363
      %1365 = vmatmul.f32.gmra.mxu0 %v1290
      %v1366 = vpop.f32.mrf.mxu0
      %v1367 = vadd.f32 0.0, %v1366
      %1368 = vmatmul.f32.gmra.mxu0 %v1291
      %v1369 = vpop.f32.mrf.mxu0
      %v1370 = vadd.f32 0.0, %v1369
      %1371 = vmatmul.f32.gmra.mxu0 %v1292
      %v1372 = vpop.f32.mrf.mxu0
      %v1373 = vadd.f32 0.0, %v1372
      %1374 = vmatmul.f32.gmra.mxu0 %v1293
      %v1375 = vpop.f32.mrf.mxu0
      %v1376 = vadd.f32 0.0, %v1375
      %1377 = vmatmul.f32.gmra.mxu0 %v1294
      %v1378 = vpop.f32.mrf.mxu0
      %v1379 = vadd.f32 0.0, %v1378
      %1380 = vmatmul.f32.gmra.mxu0 %v1295
      %v1381 = vpop.f32.mrf.mxu0
      %v1382 = vadd.f32 0.0, %v1381
      %1383 = vmatmul.f32.gmra.mxu0 %v1296
      %v1384 = vpop.f32.mrf.mxu0
      %v1385 = vadd.f32 0.0, %v1384
      %1386 = vmatmul.f32.gmra.mxu0 %v1297
      %v1387 = vpop.f32.mrf.mxu0
      %v1388 = vadd.f32 0.0, %v1387
      %1389 = vmatmul.f32.gmra.mxu0 %v1298
      %v1390 = vpop.f32.mrf.mxu0
      %v1391 = vadd.f32 0.0, %v1390
      %1392 = vmatmul.f32.gmra.mxu0 %v1299
      %v1393 = vpop.f32.mrf.mxu0
      %v1394 = vadd.f32 0.0, %v1393
      %1395 = vmatmul.f32.gmra.mxu0 %v1300
      %v1396 = vpop.f32.mrf.mxu0
      %v1397 = vadd.f32 0.0, %v1396
      %1398 = vdwg.mxu0
      %v1399 = vadd.f32 %v1301, %v1352
      %v1400 = vadd.f32 %v1302, %v1355
      %v1401 = vadd.f32 %v1303, %v1358
      %v1402 = vadd.f32 %v1304, %v1361
      %v1403 = vadd.f32 %v1305, %v1364
      %v1404 = vadd.f32 %v1306, %v1367
      %v1405 = vadd.f32 %v1307, %v1370
      %v1406 = vadd.f32 %v1308, %v1373
      %v1407 = vadd.f32 %v1309, %v1376
      %v1408 = vadd.f32 %v1310, %v1379
      %v1409 = vadd.f32 %v1311, %v1382
      %v1410 = vadd.f32 %v1312, %v1385
      %v1411 = vadd.f32 %v1313, %v1388
      %v1412 = vadd.f32 %v1314, %v1391
      %v1413 = vadd.f32 %v1315, %v1394
      %v1414 = vadd.f32 %v1316, %v1397
      %1415 = vst [vmem:[#allocation2] sm:$0xff] %v1399
      %1416 = vst [vmem:[#allocation2 + $0x8] sm:$0xff] %v1400
      %1417 = vst [vmem:[#allocation2 + $0x10] sm:$0xff] %v1401
      %1418 = vst [vmem:[#allocation2 + $0x18] sm:$0xff] %v1402
      %1419 = vst [vmem:[#allocation2 + $0x20] sm:$0xff] %v1403
      %1420 = vst [vmem:[#allocation2 + $0x28] sm:$0xff] %v1404
      %1421 = vst [vmem:[#allocation2 + $0x30] sm:$0xff] %v1405
      %1422 = vst [vmem:[#allocation2 + $0x38] sm:$0xff] %v1406
      %1423 = vst [vmem:[#allocation2 + $0x40] sm:$0xff] %v1407
      %1424 = vst [vmem:[#allocation2 + $0x48] sm:$0xff] %v1408
      %1425 = vst [vmem:[#allocation2 + $0x50] sm:$0xff] %v1409
      %1426 = vst [vmem:[#allocation2 + $0x58] sm:$0xff] %v1410
      %1427 = vst [vmem:[#allocation2 + $0x60] sm:$0xff] %v1411
      %1428 = vst [vmem:[#allocation2 + $0x68] sm:$0xff] %v1412
      %1429 = vst [vmem:[#allocation2 + $0x70] sm:$0xff] %v1413
      %1430 = vst [vmem:[#allocation2 + $0x78] sm:$0xff] %v1414
      %v1431 = vld [vmem:[%s1138 + $0x2] sm:$0xff]
      %v1432 = vld [vmem:[%s1138 + $0xa] sm:$0xff]
      %v1433 = vld [vmem:[%s1138 + $0x1a] sm:$0xff]
      %v1434 = vld [vmem:[%s1138 + $0x22] sm:$0xff]
      %v1435 = vld [vmem:[%s1138 + $0x32] sm:$0xff]
      %v1436 = vld [vmem:[%s1138 + $0x3a] sm:$0xff]
      %v1437 = vld [vmem:[%s1138 + $0x4a] sm:$0xff]
      %v1438 = vld [vmem:[%s1138 + $0x52] sm:$0xff]
      %v1439 = vld [vmem:[%s1138 + $0x62] sm:$0xff]
      %v1440 = vld [vmem:[%s1138 + $0x6a] sm:$0xff]
      %v1441 = vld [vmem:[%s1138 + $0x7a] sm:$0xff]
      %v1442 = vld [vmem:[%s1138 + $0x82] sm:$0xff]
      %v1443 = vld [vmem:[%s1138 + $0x92] sm:$0xff]
      %v1444 = vld [vmem:[%s1138 + $0x9a] sm:$0xff]
      %v1445 = vld [vmem:[%s1138 + $0xaa] sm:$0xff]
      %v1446 = vld [vmem:[%s1138 + $0xb2] sm:$0xff]
      %v1447 = vld [vmem:[#allocation2] sm:$0xff]
      %v1448 = vld [vmem:[#allocation2 + $0x8] sm:$0xff]
      %v1449 = vld [vmem:[#allocation2 + $0x10] sm:$0xff]
      %v1450 = vld [vmem:[#allocation2 + $0x18] sm:$0xff]
      %v1451 = vld [vmem:[#allocation2 + $0x20] sm:$0xff]
      %v1452 = vld [vmem:[#allocation2 + $0x28] sm:$0xff]
      %v1453 = vld [vmem:[#allocation2 + $0x30] sm:$0xff]
      %v1454 = vld [vmem:[#allocation2 + $0x38] sm:$0xff]
      %v1455 = vld [vmem:[#allocation2 + $0x40] sm:$0xff]
      %v1456 = vld [vmem:[#allocation2 + $0x48] sm:$0xff]
      %v1457 = vld [vmem:[#allocation2 + $0x50] sm:$0xff]
      %v1458 = vld [vmem:[#allocation2 + $0x58] sm:$0xff]
      %v1459 = vld [vmem:[#allocation2 + $0x60] sm:$0xff]
      %v1460 = vld [vmem:[#allocation2 + $0x68] sm:$0xff]
      %v1461 = vld [vmem:[#allocation2 + $0x70] sm:$0xff]
      %v1462 = vld [vmem:[#allocation2 + $0x78] sm:$0xff]
      %s1463 = scalar_lea.vmem %s220, 1024
      %v1464 = vld [vmem:[%s1463] sm:$0xff]
      %v1465 = vld [vmem:[%s1463 + $0x8] sm:$0xff]
      %v1466 = vld [vmem:[%s1463 + $0x10] sm:$0xff]
      %v1467 = vld [vmem:[%s1463 + $0x18] sm:$0xff]
      %v1468 = vld [vmem:[%s1463 + $0x20] sm:$0xff]
      %v1469 = vld [vmem:[%s1463 + $0x28] sm:$0xff]
      %v1470 = vld [vmem:[%s1463 + $0x30] sm:$0xff]
      %v1471 = vld [vmem:[%s1463 + $0x38] sm:$0xff]
      %v1472 = vld [vmem:[%s1463 + $0x40] sm:$0xff]
      %v1473 = vld [vmem:[%s1463 + $0x48] sm:$0xff]
      %v1474 = vld [vmem:[%s1463 + $0x50] sm:$0xff]
      %v1475 = vld [vmem:[%s1463 + $0x58] sm:$0xff]
      %v1476 = vld [vmem:[%s1463 + $0x60] sm:$0xff]
      %v1477 = vld [vmem:[%s1463 + $0x68] sm:$0xff]
      %v1478 = vld [vmem:[%s1463 + $0x70] sm:$0xff]
      %v1479 = vld [vmem:[%s1463 + $0x78] sm:$0xff]
      %1480 = vmatpush.msra.mxu0 %v1479
      %1481 = vmatpush.msra.mxu0 %v1478
      %1482 = vmatpush.msra.mxu0 %v1477
      %1483 = vmatpush.msra.mxu0 %v1476
      %1484 = vmatpush.msra.mxu0 %v1475
      %1485 = vmatpush.msra.mxu0 %v1474
      %1486 = vmatpush.msra.mxu0 %v1473
      %1487 = vmatpush.msra.mxu0 %v1472
      %1488 = vmatpush.msra.mxu0 %v1471
      %1489 = vmatpush.msra.mxu0 %v1470
      %1490 = vmatpush.msra.mxu0 %v1469
      %1491 = vmatpush.msra.mxu0 %v1468
      %1492 = vmatpush.msra.mxu0 %v1467
      %1493 = vmatpush.msra.mxu0 %v1466
      %1494 = vmatpush.msra.mxu0 %v1465
      %1495 = vmatpush.msra.mxu0 %v1464
      %1496 = vmatmul.f32.gmra.mxu0 %v1431
      %v1497 = vpop.f32.mrf.mxu0
      %v1498 = vadd.f32 0.0, %v1497
      %1499 = vmatmul.f32.gmra.mxu0 %v1432
      %v1500 = vpop.f32.mrf.mxu0
      %v1501 = vadd.f32 0.0, %v1500
      %1502 = vmatmul.f32.gmra.mxu0 %v1433
      %v1503 = vpop.f32.mrf.mxu0
      %v1504 = vadd.f32 0.0, %v1503
      %1505 = vmatmul.f32.gmra.mxu0 %v1434
      %v1506 = vpop.f32.mrf.mxu0
      %v1507 = vadd.f32 0.0, %v1506
      %1508 = vmatmul.f32.gmra.mxu0 %v1435
      %v1509 = vpop.f32.mrf.mxu0
      %v1510 = vadd.f32 0.0, %v1509
      %1511 = vmatmul.f32.gmra.mxu0 %v1436
      %v1512 = vpop.f32.mrf.mxu0
      %v1513 = vadd.f32 0.0, %v1512
      %1514 = vmatmul.f32.gmra.mxu0 %v1437
      %v1515 = vpop.f32.mrf.mxu0
      %v1516 = vadd.f32 0.0, %v1515
      %1517 = vmatmul.f32.gmra.mxu0 %v1438
      %v1518 = vpop.f32.mrf.mxu0
      %v1519 = vadd.f32 0.0, %v1518
      %1520 = vmatmul.f32.gmra.mxu0 %v1439
      %v1521 = vpop.f32.mrf.mxu0
      %v1522 = vadd.f32 0.0, %v1521
      %1523 = vmatmul.f32.gmra.mxu0 %v1440
      %v1524 = vpop.f32.mrf.mxu0
      %v1525 = vadd.f32 0.0, %v1524
      %1526 = vmatmul.f32.gmra.mxu0 %v1441
      %v1527 = vpop.f32.mrf.mxu0
      %v1528 = vadd.f32 0.0, %v1527
      %1529 = vmatmul.f32.gmra.mxu0 %v1442
      %v1530 = vpop.f32.mrf.mxu0
      %v1531 = vadd.f32 0.0, %v1530
      %1532 = vmatmul.f32.gmra.mxu0 %v1443
      %v1533 = vpop.f32.mrf.mxu0
      %v1534 = vadd.f32 0.0, %v1533
      %1535 = vmatmul.f32.gmra.mxu0 %v1444
      %v1536 = vpop.f32.mrf.mxu0
      %v1537 = vadd.f32 0.0, %v1536
      %1538 = vmatmul.f32.gmra.mxu0 %v1445
      %v1539 = vpop.f32.mrf.mxu0
      %v1540 = vadd.f32 0.0, %v1539
      %1541 = vmatmul.f32.gmra.mxu0 %v1446
      %v1542 = vpop.f32.mrf.mxu0
      %v1543 = vadd.f32 0.0, %v1542
      %1544 = vdwg.mxu0
      %v1545 = vadd.f32 %v1447, %v1498
      %v1546 = vadd.f32 %v1448, %v1501
      %v1547 = vadd.f32 %v1449, %v1504
      %v1548 = vadd.f32 %v1450, %v1507
      %v1549 = vadd.f32 %v1451, %v1510
      %v1550 = vadd.f32 %v1452, %v1513
      %v1551 = vadd.f32 %v1453, %v1516
      %v1552 = vadd.f32 %v1454, %v1519
      %v1553 = vadd.f32 %v1455, %v1522
      %v1554 = vadd.f32 %v1456, %v1525
      %v1555 = vadd.f32 %v1457, %v1528
      %v1556 = vadd.f32 %v1458, %v1531
      %v1557 = vadd.f32 %v1459, %v1534
      %v1558 = vadd.f32 %v1460, %v1537
      %v1559 = vadd.f32 %v1461, %v1540
      %v1560 = vadd.f32 %v1462, %v1543
      %1561 = vst [vmem:[#allocation2] sm:$0xff] %v1545
      %1562 = vst [vmem:[#allocation2 + $0x8] sm:$0xff] %v1546
      %1563 = vst [vmem:[#allocation2 + $0x10] sm:$0xff] %v1547
      %1564 = vst [vmem:[#allocation2 + $0x18] sm:$0xff] %v1548
      %1565 = vst [vmem:[#allocation2 + $0x20] sm:$0xff] %v1549
      %1566 = vst [vmem:[#allocation2 + $0x28] sm:$0xff] %v1550
      %1567 = vst [vmem:[#allocation2 + $0x30] sm:$0xff] %v1551
      %1568 = vst [vmem:[#allocation2 + $0x38] sm:$0xff] %v1552
      %1569 = vst [vmem:[#allocation2 + $0x40] sm:$0xff] %v1553
      %1570 = vst [vmem:[#allocation2 + $0x48] sm:$0xff] %v1554
      %1571 = vst [vmem:[#allocation2 + $0x50] sm:$0xff] %v1555
      %1572 = vst [vmem:[#allocation2 + $0x58] sm:$0xff] %v1556
      %1573 = vst [vmem:[#allocation2 + $0x60] sm:$0xff] %v1557
      %1574 = vst [vmem:[#allocation2 + $0x68] sm:$0xff] %v1558
      %1575 = vst [vmem:[#allocation2 + $0x70] sm:$0xff] %v1559
      %1576 = vst [vmem:[#allocation2 + $0x78] sm:$0xff] %v1560
      %v1577 = vld [vmem:[#allocation2] sm:$0xff]
      %v1578 = vld [vmem:[#allocation2 + $0x8] sm:$0xff]
      %v1579 = vld [vmem:[#allocation2 + $0x10] sm:$0xff]
      %v1580 = vld [vmem:[#allocation2 + $0x18] sm:$0xff]
      %v1581 = vld [vmem:[#allocation2 + $0x20] sm:$0xff]
      %v1582 = vld [vmem:[#allocation2 + $0x28] sm:$0xff]
      %v1583 = vld [vmem:[#allocation2 + $0x30] sm:$0xff]
      %v1584 = vld [vmem:[#allocation2 + $0x38] sm:$0xff]
      %v1585 = vld [vmem:[#allocation2 + $0x40] sm:$0xff]
      %v1586 = vld [vmem:[#allocation2 + $0x48] sm:$0xff]
      %v1587 = vld [vmem:[#allocation2 + $0x50] sm:$0xff]
      %v1588 = vld [vmem:[#allocation2 + $0x58] sm:$0xff]
      %v1589 = vld [vmem:[#allocation2 + $0x60] sm:$0xff]
      %v1590 = vld [vmem:[#allocation2 + $0x68] sm:$0xff]
      %v1591 = vld [vmem:[#allocation2 + $0x70] sm:$0xff]
      %v1592 = vld [vmem:[#allocation2 + $0x78] sm:$0xff]
      %1593 = vst [vmem:[%s233] sm:$0xff] %v1577
      %1594 = vst [vmem:[%s233 + $0x8] sm:$0xff] %v1578
      %1595 = vst [vmem:[%s233 + $0x10] sm:$0xff] %v1579
      %1596 = vst [vmem:[%s233 + $0x18] sm:$0xff] %v1580
      %1597 = vst [vmem:[%s233 + $0x20] sm:$0xff] %v1581
      %1598 = vst [vmem:[%s233 + $0x28] sm:$0xff] %v1582
      %1599 = vst [vmem:[%s233 + $0x30] sm:$0xff] %v1583
      %1600 = vst [vmem:[%s233 + $0x38] sm:$0xff] %v1584
      %1601 = vst [vmem:[%s233 + $0x40] sm:$0xff] %v1585
      %1602 = vst [vmem:[%s233 + $0x48] sm:$0xff] %v1586
      %1603 = vst [vmem:[%s233 + $0x50] sm:$0xff] %v1587
      %1604 = vst [vmem:[%s233 + $0x58] sm:$0xff] %v1588
      %1605 = vst [vmem:[%s233 + $0x60] sm:$0xff] %v1589
      %1606 = vst [vmem:[%s233 + $0x68] sm:$0xff] %v1590
      %1607 = vst [vmem:[%s233 + $0x70] sm:$0xff] %v1591
      %1608 = vst [vmem:[%s233 + $0x78] sm:$0xff] %v1592
      %p1609 = scmp.eq.s32.totalorder %s21, 0
      %p1610 = scmp.eq.s32.totalorder %s22, 0
      %p1611 = pnand %p1609, %p1610
      %p1612 = pneg %p1611
      // Predicated region
      $region29: #{conv_bn_forward.2} parent=27 // pred_check
        _
      $region30: #{conv_bn_forward.2} parent=27 // pred_check_branch
        %1614 = sbr.rel (%p1611) target = $region32
      $region31: #{conv_bn_forward.2} parent=27 // pred_region
        %1615 = vst [vmem:[%s238] sm:$0x3] 0.0
      $region32: #{conv_bn_forward.2} parent=27 // pred_fallthru
        _
      %v1616 = vld [vmem:[%s238] sm:$0x1]
      %v1617 = vadd.f32 %v1577, %v1578
      %v1618 = vadd.f32 %v1617, %v1579
      %v1619 = vadd.f32 %v1618, %v1580
      %v1620 = vadd.f32 %v1619, %v1581
      %v1621 = vadd.f32 %v1620, %v1582
      %v1622 = vadd.f32 %v1621, %v1583
      %v1623 = vadd.f32 %v1622, %v1584
      %v1624 = vadd.f32 %v1623, %v1585
      %v1625 = vadd.f32 %v1624, %v1586
      %v1626 = vadd.f32 %v1625, %v1587
      %v1627 = vadd.f32 %v1626, %v1588
      %v1628 = vadd.f32 %v1627, %v1589
      %v1629 = vadd.f32 %v1628, %v1590
      %v1630 = vadd.f32 %v1629, %v1591
      %v1631 = vadd.f32 %v1630, %v1592
      %v1632 = vrot.slane %v1631, 4
      %v1633 = vadd.f32 %v1631, %v1632
      %v1634 = vrot.slane %v1633, 2
      %v1635 = vadd.f32 %v1633, %v1634
      %v1636 = vrot.slane %v1635, 1
      %v1637 = vadd.f32 %v1635, %v1636
      %v1638 = vadd.f32 %v1616, %v1637
      %1639 = vst [vmem:[%s238] sm:$0x1] %v1638
      %v1640 = vld [vmem:[%s238 + $0x1] sm:$0x1]
      %v1641 = vmul.f32 %v1577, %v1577
      %v1642 = vmul.f32 %v1578, %v1578
      %v1643 = vmul.f32 %v1579, %v1579
      %v1644 = vmul.f32 %v1580, %v1580
      %v1645 = vmul.f32 %v1581, %v1581
      %v1646 = vmul.f32 %v1582, %v1582
      %v1647 = vmul.f32 %v1583, %v1583
      %v1648 = vmul.f32 %v1584, %v1584
      %v1649 = vmul.f32 %v1585, %v1585
      %v1650 = vmul.f32 %v1586, %v1586
      %v1651 = vmul.f32 %v1587, %v1587
      %v1652 = vmul.f32 %v1588, %v1588
      %v1653 = vmul.f32 %v1589, %v1589
      %v1654 = vmul.f32 %v1590, %v1590
      %v1655 = vmul.f32 %v1591, %v1591
      %v1656 = vmul.f32 %v1592, %v1592
      %v1657 = vadd.f32 %v1641, %v1642
      %v1658 = vadd.f32 %v1657, %v1643
      %v1659 = vadd.f32 %v1658, %v1644
      %v1660 = vadd.f32 %v1659, %v1645
      %v1661 = vadd.f32 %v1660, %v1646
      %v1662 = vadd.f32 %v1661, %v1647
      %v1663 = vadd.f32 %v1662, %v1648
      %v1664 = vadd.f32 %v1663, %v1649
      %v1665 = vadd.f32 %v1664, %v1650
      %v1666 = vadd.f32 %v1665, %v1651
      %v1667 = vadd.f32 %v1666, %v1652
      %v1668 = vadd.f32 %v1667, %v1653
      %v1669 = vadd.f32 %v1668, %v1654
      %v1670 = vadd.f32 %v1669, %v1655
      %v1671 = vadd.f32 %v1670, %v1656
      %v1672 = vrot.slane %v1671, 4
      %v1673 = vadd.f32 %v1671, %v1672
      %v1674 = vrot.slane %v1673, 2
      %v1675 = vadd.f32 %v1673, %v1674
      %v1676 = vrot.slane %v1675, 1
      %v1677 = vadd.f32 %v1675, %v1676
      %v1678 = vadd.f32 %v1640, %v1677
      %1679 = vst [vmem:[%s238 + $0x1] sm:$0x1] %v1678
      %s1680 = smul.u32 8, %s22
      %p1681 = scmp.lt.s32.totalorder %s21, 1
      %s1682 = scalar_select %p1681, %s21, 1
      %p1683 = scmp.lt.s32.totalorder %s1680, 15
      %s1684 = scalar_select %p1683, %s1680, 15
      %p1685 = scmp.lt.s32.totalorder %s20, 0
      %s1686 = scalar_select %p1685, %s20, 0
      %s1687 = smul.addr %s1684, 2
      %s1688 = sadd.s32 %s1686, %s1687
      %s1689 = smul.addr %s1682, 32
      %s1690 = sadd.s32 %s1688, %s1689
      %s1691 = smul.addr %s1690, 8
      %s1692 = scalar_lea.vmem %s2, %s1691
      %p1693 = scmp.lt.s32.totalorder %s20, 0
      %s1694 = scalar_select %p1693, %s20, 0
      %s1695 = smul.addr %s1694, 2
      %s1696 = scalar_lea.vmem %s3, %s1695
      // Predicated region
      $region33: #{conv_bn_forward.2} parent=27 // pred_check
        %p1697 = pneg %p108
      $region34: #{conv_bn_forward.2} parent=27 // pred_check_branch
        %1699 = sbr.rel (%p1697) target = $region36
      $region35: #{conv_bn_forward.2} parent=27 // pred_region
        %s1700 = smul.u32 8, %s22
      $region36: #{conv_bn_forward.2} parent=27 // pred_fallthru
        _
      // Predicated region
      $region37: #{conv_bn_forward.2} parent=27 // pred_check
        %p1701 = pneg %p134
      $region38: #{conv_bn_forward.2} parent=27 // pred_check_branch
        %1703 = sbr.rel (%p1701) target = $region40
      $region39: #{conv_bn_forward.2} parent=27 // pred_region
        _
      $region40: #{conv_bn_forward.2} parent=27 // pred_fallthru
        _
      // Predicated region
      $region41: #{conv_bn_forward.2} parent=27 // pred_check
        %p1704 = pneg %p134
      $region42: #{conv_bn_forward.2} parent=27 // pred_check_branch
        %1706 = sbr.rel (%p1704) target = $region44
      $region43: #{conv_bn_forward.2} parent=27 // pred_region
        %p1707 = scmp.lt.s32.totalorder %s20, 0
        %s1708 = scalar_select %p1707, %s20, 0
        %s1709 = smul.addr %s1708, 2
        %s1710 = scalar_lea.vmem %s3, %s1709
      $region44: #{conv_bn_forward.2} parent=27 // pred_fallthru
        _
    $region28: #{conv_bn_forward.2} parent=5 // pred_fallthru
      _
    %p1711 = scmp.le.s32.totalorder 2, %s10
    // Predicated region
    $region45: #{conv_bn_forward.2} parent=5 // pred_check
      %p1712 = pneg %p1711
    $region46: #{conv_bn_forward.2} parent=5 // pred_check_branch
      %1714 = sbr.rel (%p1712) target = $region48
    $region47: #{conv_bn_forward.2} parent=5 // pred_region
      %s1715 = ssub.s32 %s10, 2
      // Predicated region
      $region49: #{conv_bn_forward.2} parent=47 // pred_check
        %p1716 = pneg %p114
      $region50: #{conv_bn_forward.2} parent=47 // pred_check_branch
        %1718 = sbr.rel (%p1716) target = $region52
      $region51: #{conv_bn_forward.2} parent=47 // pred_region
        %s1719 = smul.u32 8, %s25
        %p1720 = scmp.lt.s32.totalorder %s24, 1
        %s1721 = scalar_select %p1720, %s24, 1
        %p1722 = scmp.lt.s32.totalorder %s1719, 15
        %s1723 = scalar_select %p1722, %s1719, 15
        %p1724 = scmp.lt.s32.totalorder %s23, 0
        %s1725 = scalar_select %p1724, %s23, 0
        %s1726 = smul.addr %s1723, 2
        %s1727 = sadd.s32 %s1725, %s1726
        %s1728 = smul.addr %s1721, 32
        %s1729 = sadd.s32 %s1727, %s1728
        %s1730 = smul.addr %s1729, 8
        %s1731 = scalar_lea.vmem %s2, %s1730
      $region52: #{conv_bn_forward.2} parent=47 // pred_fallthru
        _
    $region48: #{conv_bn_forward.2} parent=5 // pred_fallthru
      _
  $region6: #{conv_bn_forward.2} parent=0 // loop_footer
    %s14 = sadd.s32 1, %s10
  $region7: #{conv_bn_forward.2} parent=0 // loop_footer_branch
    %9 = sbr.rel target = $region3
  $region8: #{conv_bn_forward.2} parent=0 // loop_exit
    _

</llo_original>
